<compile_context>
chip_gen: v6e
topology: v6e:2x2x1
jax: 0.10.0
libtpu: 0.0.40
codegen_flags: <defaults>
</compile_context>

<pallas_src>
import numpy as np
import jax
import jax.numpy as jnp
from jax.experimental import pallas as pl
from jax.experimental.pallas import tpu as pltpu

LEAK = 0.2
BN_EPS = 1e-5


# ----------------------------------------------------------------------------
# constant-operator construction (shapes only -> trace-time numpy constants)
# ----------------------------------------------------------------------------
def _interp_matrix(out_n, in_n):
    """align_corners=True linear interpolation matrix, shape (out_n, in_n)."""
    if in_n == 1:
        return np.ones((out_n, 1), np.float32)
    s = np.arange(out_n, dtype=np.float64) * (in_n - 1) / (out_n - 1)
    lo = np.minimum(np.floor(s).astype(np.int64), in_n - 1)
    hi = np.minimum(lo + 1, in_n - 1)
    f = (s - lo).astype(np.float32)
    m = np.zeros((out_n, in_n), np.float32)
    m[np.arange(out_n), lo] += (1.0 - f)
    m[np.arange(out_n), hi] += f
    return m


def _build_up_constants(n, h, w):
    """Returns:
      m_up   : (Pd, Pu) bilinear-x2 (align_corners) upsample operator,
               block-diagonal over the batch, Pd = N*Ho*Wo, Pu = N*H*W.
      masks  : (9, Pu) float validity masks of the 9 zero-padded 3x3 taps.
      shifts : 9 flat-index offsets d = dy*W + dx, tap order (dy,dx) row-major.
    """
    ho, wo = h // 2, w // 2
    lh = _interp_matrix(h, ho)                              # (H, Ho)
    lw = _interp_matrix(w, wo)                              # (W, Wo)
    # m_sp[(j,i), (y,x)] = lh[y, j] * lw[x, i]
    m_sp = np.einsum("yj,xi->jiyx", lh, lw).reshape(ho * wo, h * w)
    m_up = np.kron(np.eye(n, dtype=np.float32), m_sp).astype(np.float32)

    ys, xs = np.meshgrid(np.arange(h), np.arange(w), indexing="ij")
    shifts, masks = [], []
    for dy in (-1, 0, 1):
        for dx in (-1, 0, 1):
            valid = ((ys + dy >= 0) & (ys + dy < h) &
                     (xs + dx >= 0) & (xs + dx < w)).astype(np.float32)
            masks.append(np.tile(valid.reshape(-1), n))     # same mask per batch elem
            shifts.append(dy * w + dx)
    return m_up, np.stack(masks, 0).astype(np.float32), shifts


def _im2col_down(x):
    """(N,C,H,W) -> (C*16, N*Ho*Wo) patches of the 4x4/s2/p1 conv, channel-major."""
    n, c, h, w = x.shape
    ho, wo = h // 2, w // 2
    xp = jnp.pad(x, ((0, 0), (0, 0), (1, 1), (1, 1)))
    cols = []
    for ky in range(4):
        for kx in range(4):
            cols.append(xp[:, :, ky:ky + 2 * ho - 1:2, kx:kx + 2 * wo - 1:2])
    p = jnp.stack(cols, 0).reshape(4, 4, n, c, ho, wo)
    p = jnp.transpose(p, (3, 0, 1, 2, 4, 5))            # (C, ky, kx, N, Ho, Wo)
    return p.reshape(c * 16, n * ho * wo)


# ----------------------------------------------------------------------------
# the fused kernel
# ----------------------------------------------------------------------------
def _make_unet_inner_kernel(shifts, pad):
    """Kernel factory closing over static tap shifts and the halo width."""

    def kernel(xcm_ref, xp_ref, x1_ref, wd_ref, wu_ref, mup_ref, msk_ref, gb_ref,
               o_ref, act_ref, vbuf_ref):
        cin = xcm_ref.shape[0]
        inner_nc = wd_ref.shape[0]
        cout = gb_ref.shape[0] // 2
        pu = o_ref.shape[1]

        # skip connection: first `cin` channel-major rows of the output are x itself.
        o_ref[0:cin, :] = xcm_ref[...]

        # ---- down path: LeakyReLU(0.2) then Conv2d(k=4, s=2, p=1, bias=False) ----
        xp = xp_ref[...]
        xp = jnp.where(xp > 0, xp, LEAK * xp)
        inner = jnp.dot(wd_ref[...], xp, preferred_element_type=jnp.float32)  # (inner, Pd)

        # ---- cat([down, x1], channel) then ReLU, staged channel-major in VMEM ----
        act_ref[...] = jnp.zeros(act_ref.shape, act_ref.dtype)   # zero padded rows
        act_ref[0:inner_nc, :] = inner
        act_ref[inner_nc:inner_nc + 1, :] = x1_ref[...]
        a = jnp.maximum(act_ref[...], 0.0)                       # (cmid_pad, Pd)

        # ---- bilinear x2 upsample (align_corners) as one lane-dense matmul ----
        u = jnp.dot(a, mup_ref[...], preferred_element_type=jnp.float32)  # (cmid_pad, Pu)

        # ---- 3x3 conv (p=1): per-tap channel mixing + lane-shifted, masked
        #      accumulation via a zero-padded VMEM halo buffer (static slices only).
        vbuf_ref[:, 0:pad] = jnp.zeros((cout, pad), jnp.float32)
        vbuf_ref[:, pad + pu:pad + pu + pad] = jnp.zeros((cout, pad), jnp.float32)
        z = jnp.zeros((cout, pu), jnp.float32)
        for t, d in enumerate(shifts):
            v = jnp.dot(wu_ref[t], u, preferred_element_type=jnp.float32)   # (cout, Pu)
            if d == 0:
                z = z + v                                  # center tap: mask == 1
            else:
                vbuf_ref[:, pad:pad + pu] = v
                # out[:, p] += v[:, p + d] * valid_tap(p)
                z = z + vbuf_ref[:, pad + d:pad + d + pu] * msk_ref[t:t + 1, :]
        # NOTE: the 3x3 conv bias is intentionally omitted here - it cancels exactly
        # inside the training-mode BatchNorm below.

        # ---- BatchNorm2d(outer_nc): training-mode stats over N*H*W (lane axis),
        #      single fused pass for sum and sum-of-squares.
        s1 = jnp.sum(z, axis=1, keepdims=True)
        s2 = jnp.sum(z * z, axis=1, keepdims=True)
        mean = s1 * (1.0 / pu)
        var = s2 * (1.0 / pu) - mean * mean
        gamma = gb_ref[0:cout, :]
        beta = gb_ref[cout:2 * cout, :]
        o_ref[cin:cin + cout, :] = (z - mean) * jax.lax.rsqrt(var + BN_EPS) * gamma + beta

    return kernel


# ----------------------------------------------------------------------------
# wrapper
# ----------------------------------------------------------------------------
def unet_innermost_forward(x, x1, params):
    """x: (N, input_nc, H, W), x1: (N, 1, H/2, W/2) -> (N, input_nc+outer_nc, H, W)."""
    wd, wu, bu, gamma, beta = params          # bu unused in-kernel (cancels in BN)
    n, cin, h, w = x.shape
    inner_nc = wd.shape[0]
    outer_nc = wu.shape[0]
    cmid = inner_nc + 1
    cmid_p = ((cmid + 7) // 8) * 8
    ho, wo = h // 2, w // 2
    pd, pu = n * ho * wo, n * h * w
    pad = max(128, ((w + 2 + 127) // 128) * 128)   # lane-aligned halo >= max |tap shift|

    # layout plumbing (gathers / reshapes of inputs) + constant folding of the
    # shape-only spatial operator and tap masks.
    xcm = jnp.transpose(x, (1, 0, 2, 3)).reshape(cin, pu)           # skip rows
    xp = _im2col_down(x)                                            # (cin*16, Pd)
    x1f = jnp.transpose(x1, (1, 0, 2, 3)).reshape(1, pd)            # label row
    wd2 = wd.reshape(inner_nc, cin * 16)
    wu_t = jnp.transpose(wu, (2, 3, 0, 1)).reshape(9, outer_nc, cmid)
    wu_t = jnp.pad(wu_t, ((0, 0), (0, 0), (0, cmid_p - cmid)))      # (9, cout, cmid_p)
    m_up_np, masks_np, shifts = _build_up_constants(n, h, w)
    m_up = jnp.asarray(m_up_np)                                     # (Pd, Pu)
    masks = jnp.asarray(masks_np)                                   # (9, Pu)
    gb = jnp.concatenate([gamma, beta]).reshape(2 * outer_nc, 1)    # one tiny operand

    vmem = pl.BlockSpec(memory_space=pltpu.MemorySpace.VMEM)
    inputs = (xcm, xp, x1f, wd2, wu_t, m_up, masks, gb)

    out_cm = pl.pallas_call(
        _make_unet_inner_kernel(shifts, pad),
        out_shape=jax.ShapeDtypeStruct((cin + outer_nc, pu), jnp.float32),
        in_specs=[vmem] * len(inputs),
        out_specs=vmem,
        scratch_shapes=[
            pltpu.VMEM((cmid_p, pd), jnp.float32),              # relu(cat(inner, x1))
            pltpu.VMEM((outer_nc, pu + 2 * pad), jnp.float32),  # halo buffer for tap shifts
        ],
    )(*inputs)

    # (cin+outer, N*H*W) channel-major -> (N, cin+outer, H, W)
    return jnp.transpose(out_cm.reshape(cin + outer_nc, n, h, w), (1, 0, 2, 3))


# ----------------------------------------------------------------------------
# synthetic params + plain-JAX reference (mirrors the PyTorch graph)
# ----------------------------------------------------------------------------
def init_params(key, input_nc, inner_nc, outer_nc):
    k1, k2, k3, k4, k5 = jax.random.split(key, 5)
    wd = 0.1 * jax.random.normal(k1, (inner_nc, input_nc, 4, 4), jnp.float32)
    wu = 0.1 * jax.random.normal(k2, (outer_nc, inner_nc + 1, 3, 3), jnp.float32)
    bu = 0.1 * jax.random.normal(k3, (outer_nc,), jnp.float32)
    gamma = 1.0 + 0.1 * jax.random.normal(k4, (outer_nc,), jnp.float32)
    beta = 0.1 * jax.random.normal(k5, (outer_nc,), jnp.float32)
    return (wd, wu, bu, gamma, beta)


def _bilinear_up2_align_corners(t):
    n, c, hi, wi = t.shape
    ho, wo = 2 * hi, 2 * wi
    ys = jnp.arange(ho, dtype=jnp.float32) * (hi - 1) / (ho - 1)
    y0 = jnp.floor(ys).astype(jnp.int32)
    y1 = jnp.minimum(y0 + 1, hi - 1)
    fy = (ys - y0.astype(jnp.float32))[None, None, :, None]
    xs = jnp.arange(wo, dtype=jnp.float32) * (wi - 1) / (wo - 1)
    x0 = jnp.floor(xs).astype(jnp.int32)
    x1i = jnp.minimum(x0 + 1, wi - 1)
    fx = (xs - x0.astype(jnp.float32))[None, None, None, :]
    th = (1.0 - fy) * t[:, :, y0, :] + fy * t[:, :, y1, :]
    return (1.0 - fx) * th[:, :, :, x0] + fx * th[:, :, :, x1i]


def reference_forward(x, x1, params):
    wd, wu, bu, gamma, beta = params
    d = jnp.where(x > 0, x, LEAK * x)
    inner = jax.lax.conv_general_dilated(
        d, wd, window_strides=(2, 2), padding=((1, 1), (1, 1)),
        dimension_numbers=("NCHW", "OIHW", "NCHW"))
    inner = jnp.concatenate([inner, x1], axis=1)
    u = jnp.maximum(inner, 0.0)
    u = _bilinear_up2_align_corners(u)
    u = jax.lax.conv_general_dilated(
        u, wu, window_strides=(1, 1), padding=((1, 1), (1, 1)),
        dimension_numbers=("NCHW", "OIHW", "NCHW")) + bu[None, :, None, None]
    mean = jnp.mean(u, axis=(0, 2, 3), keepdims=True)
    var = jnp.mean((u - mean) ** 2, axis=(0, 2, 3), keepdims=True)
    u = (u - mean) * jax.lax.rsqrt(var + BN_EPS)
    u = u * gamma[None, :, None, None] + beta[None, :, None, None]
    return jnp.concatenate([x, u], axis=1)


if __name__ == "__main__":
    key = jax.random.PRNGKey(0)
    kx, kl, kp = jax.random.split(key, 3)

    N, input_nc, H, W = 2, 4, 16, 16     # input_nc defaults to outer_nc in the module
    inner_nc, outer_nc = 32, 4

    x = jax.random.normal(kx, (N, input_nc, H, W), jnp.float32)
    x1 = jax.random.normal(kl, (N, 1, H // 2, W // 2), jnp.float32)
    params = init_params(kp, input_nc, inner_nc, outer_nc)

    out = jax.block_until_ready(unet_innermost_forward(x, x1, params))
    ref = jax.block_until_ready(reference_forward(x, x1, params))

    assert out.shape == (N, input_nc + outer_nc, H, W), out.shape
    err = float(jnp.max(jnp.abs(out - ref)))
    assert err < 2e-3, f"max abs err {err}"
    print("KERNEL_OK")
</pallas_src>

<mosaic_0001>
module attributes {stable_mosaic.version = 11 : i64} {
  func.func @kernel(%arg0: memref<4x512xf32, #tpu.memory_space<vmem>>, %arg1: memref<64x128xf32, #tpu.memory_space<vmem>>, %arg2: memref<1x128xf32, #tpu.memory_space<vmem>>, %arg3: memref<32x64xf32, #tpu.memory_space<vmem>>, %arg4: memref<9x4x40xf32, #tpu.memory_space<vmem>>, %arg5: memref<128x512xf32, #tpu.memory_space<vmem>>, %arg6: memref<9x512xf32, #tpu.memory_space<vmem>>, %arg7: memref<8x1xf32, #tpu.memory_space<vmem>>, %arg8: memref<8x512xf32, #tpu.memory_space<vmem>>, %arg9: memref<40x128xf32, #tpu.memory_space<vmem>>, %arg10: memref<4x768xf32, #tpu.memory_space<vmem>>) attributes {dimension_semantics = [], scalar_prefetch = 0 : i64, scratch_operands = 2 : i64, tpu.core_type = #tpu.core_type<tc>} {
    %c0 = arith.constant 0 : index
    %c0_0 = arith.constant 0 : index
    %0 = vector.load %arg0[%c0, %c0_0] : memref<4x512xf32, #tpu.memory_space<vmem>>, vector<4x512xf32>
    %c0_1 = arith.constant 0 : index
    %c0_2 = arith.constant 0 : index
    %1 = vector.load %arg8[%c0_1, %c0_2] : memref<8x512xf32, #tpu.memory_space<vmem>>, vector<4x512xf32>
    tpu.vector_store %arg8[%c0_1, %c0_2], %0 {strides = array<i32>} : memref<8x512xf32, #tpu.memory_space<vmem>>, vector<4x512xf32>,
    %c0_3 = arith.constant 0 : index
    %c0_4 = arith.constant 0 : index
    %2 = vector.load %arg1[%c0_3, %c0_4] : memref<64x128xf32, #tpu.memory_space<vmem>>, vector<64x128xf32>
    %cst = arith.constant 0.000000e+00 : f32
    %3 = vector.broadcast %cst : f32 to vector<64x128xf32>
    %4 = arith.cmpf ogt, %2, %3 : vector<64x128xf32>
    %cst_5 = arith.constant 2.000000e-01 : f32
    %5 = vector.broadcast %cst_5 : f32 to vector<64x128xf32>
    %6 = arith.mulf %5, %2 : vector<64x128xf32>
    %7 = arith.select %4, %2, %6 : vector<64x128xi1>, vector<64x128xf32>
    %c0_6 = arith.constant 0 : index
    %c0_7 = arith.constant 0 : index
    %8 = vector.load %arg3[%c0_6, %c0_7] : memref<32x64xf32, #tpu.memory_space<vmem>>, vector<32x64xf32>
    %cst_8 = arith.constant dense<0.000000e+00> : vector<32x128xf32>
    %9 = tpu.matmul %8, %7, %cst_8 {dimension_numbers = #tpu.dot_dimension_numbers<[1], [0], [0], [1], [0, 0, 1, 1], [], []>} : vector<32x64xf32>, vector<64x128xf32>, vector<32x128xf32> -> vector<32x128xf32>
    %cst_9 = arith.constant 0.000000e+00 : f32
    %10 = vector.broadcast %cst_9 : f32 to vector<40x128xf32>
    %c0_10 = arith.constant 0 : index
    %c0_11 = arith.constant 0 : index
    %11 = vector.load %arg9[%c0_10, %c0_11] : memref<40x128xf32, #tpu.memory_space<vmem>>, vector<40x128xf32>
    tpu.vector_store %arg9[%c0_10, %c0_11], %10 {strides = array<i32>} : memref<40x128xf32, #tpu.memory_space<vmem>>, vector<40x128xf32>,
    %c0_12 = arith.constant 0 : index
    %c0_13 = arith.constant 0 : index
    %12 = vector.load %arg9[%c0_12, %c0_13] : memref<40x128xf32, #tpu.memory_space<vmem>>, vector<32x128xf32>
    tpu.vector_store %arg9[%c0_12, %c0_13], %9 {strides = array<i32>} : memref<40x128xf32, #tpu.memory_space<vmem>>, vector<32x128xf32>,
    %c0_14 = arith.constant 0 : index
    %c0_15 = arith.constant 0 : index
    %13 = vector.load %arg2[%c0_14, %c0_15] : memref<1x128xf32, #tpu.memory_space<vmem>>, vector<1x128xf32>
    %c32 = arith.constant 32 : index
    %c0_16 = arith.constant 0 : index
    %14 = vector.load %arg9[%c32, %c0_16] : memref<40x128xf32, #tpu.memory_space<vmem>>, vector<1x128xf32>
    tpu.vector_store %arg9[%c32, %c0_16], %13 {strides = array<i32>} : memref<40x128xf32, #tpu.memory_space<vmem>>, vector<1x128xf32>,
    %c0_17 = arith.constant 0 : index
    %c0_18 = arith.constant 0 : index
    %15 = vector.load %arg9[%c0_17, %c0_18] : memref<40x128xf32, #tpu.memory_space<vmem>>, vector<40x128xf32>
    %cst_19 = arith.constant 0.000000e+00 : f32
    %16 = vector.broadcast %cst_19 : f32 to vector<40x128xf32>
    %17 = arith.maximumf %15, %16 : vector<40x128xf32>
    %c0_20 = arith.constant 0 : index
    %c0_21 = arith.constant 0 : index
    %18 = vector.load %arg5[%c0_20, %c0_21] : memref<128x512xf32, #tpu.memory_space<vmem>>, vector<128x512xf32>
    %cst_22 = arith.constant dense<0.000000e+00> : vector<40x512xf32>
    %19 = tpu.matmul %17, %18, %cst_22 {dimension_numbers = #tpu.dot_dimension_numbers<[1], [0], [0], [1], [0, 0, 1, 1], [], []>} : vector<40x128xf32>, vector<128x512xf32>, vector<40x512xf32> -> vector<40x512xf32>
    %cst_23 = arith.constant 0.000000e+00 : f32
    %20 = vector.broadcast %cst_23 : f32 to vector<4x128xf32>
    %c0_24 = arith.constant 0 : index
    %c0_25 = arith.constant 0 : index
    %21 = vector.load %arg10[%c0_24, %c0_25] : memref<4x768xf32, #tpu.memory_space<vmem>>, vector<4x128xf32>
    tpu.vector_store %arg10[%c0_24, %c0_25], %20 {strides = array<i32>} : memref<4x768xf32, #tpu.memory_space<vmem>>, vector<4x128xf32>,
    %cst_26 = arith.constant 0.000000e+00 : f32
    %22 = vector.broadcast %cst_26 : f32 to vector<4x128xf32>
    %c0_27 = arith.constant 0 : index
    %c640 = arith.constant 640 : index
    %23 = vector.load %arg10[%c0_27, %c640] : memref<4x768xf32, #tpu.memory_space<vmem>>, vector<4x128xf32>
    tpu.vector_store %arg10[%c0_27, %c640], %22 {strides = array<i32>} : memref<4x768xf32, #tpu.memory_space<vmem>>, vector<4x128xf32>,
    %cst_28 = arith.constant 0.000000e+00 : f32
    %24 = vector.broadcast %cst_28 : f32 to vector<4x512xf32>
    %c0_29 = arith.constant 0 : index
    %c0_30 = arith.constant 0 : index
    %c0_31 = arith.constant 0 : index
    %25 = vector.load %arg4[%c0_29, %c0_30, %c0_31] : memref<9x4x40xf32, #tpu.memory_space<vmem>>, vector<1x4x40xf32>
    %26 = vector.shape_cast %25 : vector<1x4x40xf32> to vector<4x40xf32>
    %cst_32 = arith.constant dense<0.000000e+00> : vector<4x512xf32>
    %27 = tpu.matmul %26, %19, %cst_32 {dimension_numbers = #tpu.dot_dimension_numbers<[1], [0], [0], [1], [0, 0, 1, 1], [], []>} : vector<4x40xf32>, vector<40x512xf32>, vector<4x512xf32> -> vector<4x512xf32>
    %c0_33 = arith.constant 0 : index
    %c128 = arith.constant 128 : index
    %28 = vector.load %arg10[%c0_33, %c128] : memref<4x768xf32, #tpu.memory_space<vmem>>, vector<4x512xf32>
    tpu.vector_store %arg10[%c0_33, %c128], %27 {strides = array<i32>} : memref<4x768xf32, #tpu.memory_space<vmem>>, vector<4x512xf32>,
    %c0_34 = arith.constant 0 : index
    %c111 = arith.constant 111 : index
    %29 = vector.load %arg10[%c0_34, %c111] : memref<4x768xf32, #tpu.memory_space<vmem>>, vector<4x512xf32>
    %c0_35 = arith.constant 0 : index
    %c0_36 = arith.constant 0 : index
    %30 = vector.load %arg6[%c0_35, %c0_36] : memref<9x512xf32, #tpu.memory_space<vmem>>, vector<1x512xf32>
    %31 = vector.broadcast %30 : vector<1x512xf32> to vector<4x512xf32>
    %32 = arith.mulf %29, %31 : vector<4x512xf32>
    %33 = arith.addf %24, %32 : vector<4x512xf32>
    %c1 = arith.constant 1 : index
    %c0_37 = arith.constant 0 : index
    %c0_38 = arith.constant 0 : index
    %34 = vector.load %arg4[%c1, %c0_37, %c0_38] : memref<9x4x40xf32, #tpu.memory_space<vmem>>, vector<1x4x40xf32>
    %35 = vector.shape_cast %34 : vector<1x4x40xf32> to vector<4x40xf32>
    %cst_39 = arith.constant dense<0.000000e+00> : vector<4x512xf32>
    %36 = tpu.matmul %35, %19, %cst_39 {dimension_numbers = #tpu.dot_dimension_numbers<[1], [0], [0], [1], [0, 0, 1, 1], [], []>} : vector<4x40xf32>, vector<40x512xf32>, vector<4x512xf32> -> vector<4x512xf32>
    %c0_40 = arith.constant 0 : index
    %c128_41 = arith.constant 128 : index
    %37 = vector.load %arg10[%c0_40, %c128_41] : memref<4x768xf32, #tpu.memory_space<vmem>>, vector<4x512xf32>
    tpu.vector_store %arg10[%c0_40, %c128_41], %36 {strides = array<i32>} : memref<4x768xf32, #tpu.memory_space<vmem>>, vector<4x512xf32>,
    %c0_42 = arith.constant 0 : index
    %c112 = arith.constant 112 : index
    %38 = vector.load %arg10[%c0_42, %c112] : memref<4x768xf32, #tpu.memory_space<vmem>>, vector<4x512xf32>
    %c1_43 = arith.constant 1 : index
    %c0_44 = arith.constant 0 : index
    %39 = vector.load %arg6[%c1_43, %c0_44] : memref<9x512xf32, #tpu.memory_space<vmem>>, vector<1x512xf32>
    %40 = vector.broadcast %39 : vector<1x512xf32> to vector<4x512xf32>
    %41 = arith.mulf %38, %40 : vector<4x512xf32>
    %42 = arith.addf %33, %41 : vector<4x512xf32>
    %c2 = arith.constant 2 : index
    %c0_45 = arith.constant 0 : index
    %c0_46 = arith.constant 0 : index
    %43 = vector.load %arg4[%c2, %c0_45, %c0_46] : memref<9x4x40xf32, #tpu.memory_space<vmem>>, vector<1x4x40xf32>
    %44 = vector.shape_cast %43 : vector<1x4x40xf32> to vector<4x40xf32>
    %cst_47 = arith.constant dense<0.000000e+00> : vector<4x512xf32>
    %45 = tpu.matmul %44, %19, %cst_47 {dimension_numbers = #tpu.dot_dimension_numbers<[1], [0], [0], [1], [0, 0, 1, 1], [], []>} : vector<4x40xf32>, vector<40x512xf32>, vector<4x512xf32> -> vector<4x512xf32>
    %c0_48 = arith.constant 0 : index
    %c128_49 = arith.constant 128 : index
    %46 = vector.load %arg10[%c0_48, %c128_49] : memref<4x768xf32, #tpu.memory_space<vmem>>, vector<4x512xf32>
    tpu.vector_store %arg10[%c0_48, %c128_49], %45 {strides = array<i32>} : memref<4x768xf32, #tpu.memory_space<vmem>>, vector<4x512xf32>,
    %c0_50 = arith.constant 0 : index
    %c113 = arith.constant 113 : index
    %47 = vector.load %arg10[%c0_50, %c113] : memref<4x768xf32, #tpu.memory_space<vmem>>, vector<4x512xf32>
    %c2_51 = arith.constant 2 : index
    %c0_52 = arith.constant 0 : index
    %48 = vector.load %arg6[%c2_51, %c0_52] : memref<9x512xf32, #tpu.memory_space<vmem>>, vector<1x512xf32>
    %49 = vector.broadcast %48 : vector<1x512xf32> to vector<4x512xf32>
    %50 = arith.mulf %47, %49 : vector<4x512xf32>
    %51 = arith.addf %42, %50 : vector<4x512xf32>
    %c3 = arith.constant 3 : index
    %c0_53 = arith.constant 0 : index
    %c0_54 = arith.constant 0 : index
    %52 = vector.load %arg4[%c3, %c0_53, %c0_54] : memref<9x4x40xf32, #tpu.memory_space<vmem>>, vector<1x4x40xf32>
    %53 = vector.shape_cast %52 : vector<1x4x40xf32> to vector<4x40xf32>
    %cst_55 = arith.constant dense<0.000000e+00> : vector<4x512xf32>
    %54 = tpu.matmul %53, %19, %cst_55 {dimension_numbers = #tpu.dot_dimension_numbers<[1], [0], [0], [1], [0, 0, 1, 1], [], []>} : vector<4x40xf32>, vector<40x512xf32>, vector<4x512xf32> -> vector<4x512xf32>
    %c0_56 = arith.constant 0 : index
    %c128_57 = arith.constant 128 : index
    %55 = vector.load %arg10[%c0_56, %c128_57] : memref<4x768xf32, #tpu.memory_space<vmem>>, vector<4x512xf32>
    tpu.vector_store %arg10[%c0_56, %c128_57], %54 {strides = array<i32>} : memref<4x768xf32, #tpu.memory_space<vmem>>, vector<4x512xf32>,
    %c0_58 = arith.constant 0 : index
    %c127 = arith.constant 127 : index
    %56 = vector.load %arg10[%c0_58, %c127] : memref<4x768xf32, #tpu.memory_space<vmem>>, vector<4x512xf32>
    %c3_59 = arith.constant 3 : index
    %c0_60 = arith.constant 0 : index
    %57 = vector.load %arg6[%c3_59, %c0_60] : memref<9x512xf32, #tpu.memory_space<vmem>>, vector<1x512xf32>
    %58 = vector.broadcast %57 : vector<1x512xf32> to vector<4x512xf32>
    %59 = arith.mulf %56, %58 : vector<4x512xf32>
    %60 = arith.addf %51, %59 : vector<4x512xf32>
    %c4 = arith.constant 4 : index
    %c0_61 = arith.constant 0 : index
    %c0_62 = arith.constant 0 : index
    %61 = vector.load %arg4[%c4, %c0_61, %c0_62] : memref<9x4x40xf32, #tpu.memory_space<vmem>>, vector<1x4x40xf32>
    %62 = vector.shape_cast %61 : vector<1x4x40xf32> to vector<4x40xf32>
    %cst_63 = arith.constant dense<0.000000e+00> : vector<4x512xf32>
    %63 = tpu.matmul %62, %19, %cst_63 {dimension_numbers = #tpu.dot_dimension_numbers<[1], [0], [0], [1], [0, 0, 1, 1], [], []>} : vector<4x40xf32>, vector<40x512xf32>, vector<4x512xf32> -> vector<4x512xf32>
    %64 = arith.addf %60, %63 : vector<4x512xf32>
    %c5 = arith.constant 5 : index
    %c0_64 = arith.constant 0 : index
    %c0_65 = arith.constant 0 : index
    %65 = vector.load %arg4[%c5, %c0_64, %c0_65] : memref<9x4x40xf32, #tpu.memory_space<vmem>>, vector<1x4x40xf32>
    %66 = vector.shape_cast %65 : vector<1x4x40xf32> to vector<4x40xf32>
    %cst_66 = arith.constant dense<0.000000e+00> : vector<4x512xf32>
    %67 = tpu.matmul %66, %19, %cst_66 {dimension_numbers = #tpu.dot_dimension_numbers<[1], [0], [0], [1], [0, 0, 1, 1], [], []>} : vector<4x40xf32>, vector<40x512xf32>, vector<4x512xf32> -> vector<4x512xf32>
    %c0_67 = arith.constant 0 : index
    %c128_68 = arith.constant 128 : index
    %68 = vector.load %arg10[%c0_67, %c128_68] : memref<4x768xf32, #tpu.memory_space<vmem>>, vector<4x512xf32>
    tpu.vector_store %arg10[%c0_67, %c128_68], %67 {strides = array<i32>} : memref<4x768xf32, #tpu.memory_space<vmem>>, vector<4x512xf32>,
    %c0_69 = arith.constant 0 : index
    %c129 = arith.constant 129 : index
    %69 = vector.load %arg10[%c0_69, %c129] : memref<4x768xf32, #tpu.memory_space<vmem>>, vector<4x512xf32>
    %c5_70 = arith.constant 5 : index
    %c0_71 = arith.constant 0 : index
    %70 = vector.load %arg6[%c5_70, %c0_71] : memref<9x512xf32, #tpu.memory_space<vmem>>, vector<1x512xf32>
    %71 = vector.broadcast %70 : vector<1x512xf32> to vector<4x512xf32>
    %72 = arith.mulf %69, %71 : vector<4x512xf32>
    %73 = arith.addf %64, %72 : vector<4x512xf32>
    %c6 = arith.constant 6 : index
    %c0_72 = arith.constant 0 : index
    %c0_73 = arith.constant 0 : index
    %74 = vector.load %arg4[%c6, %c0_72, %c0_73] : memref<9x4x40xf32, #tpu.memory_space<vmem>>, vector<1x4x40xf32>
    %75 = vector.shape_cast %74 : vector<1x4x40xf32> to vector<4x40xf32>
    %cst_74 = arith.constant dense<0.000000e+00> : vector<4x512xf32>
    %76 = tpu.matmul %75, %19, %cst_74 {dimension_numbers = #tpu.dot_dimension_numbers<[1], [0], [0], [1], [0, 0, 1, 1], [], []>} : vector<4x40xf32>, vector<40x512xf32>, vector<4x512xf32> -> vector<4x512xf32>
    %c0_75 = arith.constant 0 : index
    %c128_76 = arith.constant 128 : index
    %77 = vector.load %arg10[%c0_75, %c128_76] : memref<4x768xf32, #tpu.memory_space<vmem>>, vector<4x512xf32>
    tpu.vector_store %arg10[%c0_75, %c128_76], %76 {strides = array<i32>} : memref<4x768xf32, #tpu.memory_space<vmem>>, vector<4x512xf32>,
    %c0_77 = arith.constant 0 : index
    %c143 = arith.constant 143 : index
    %78 = vector.load %arg10[%c0_77, %c143] : memref<4x768xf32, #tpu.memory_space<vmem>>, vector<4x512xf32>
    %c6_78 = arith.constant 6 : index
    %c0_79 = arith.constant 0 : index
    %79 = vector.load %arg6[%c6_78, %c0_79] : memref<9x512xf32, #tpu.memory_space<vmem>>, vector<1x512xf32>
    %80 = vector.broadcast %79 : vector<1x512xf32> to vector<4x512xf32>
    %81 = arith.mulf %78, %80 : vector<4x512xf32>
    %82 = arith.addf %73, %81 : vector<4x512xf32>
    %c7 = arith.constant 7 : index
    %c0_80 = arith.constant 0 : index
    %c0_81 = arith.constant 0 : index
    %83 = vector.load %arg4[%c7, %c0_80, %c0_81] : memref<9x4x40xf32, #tpu.memory_space<vmem>>, vector<1x4x40xf32>
    %84 = vector.shape_cast %83 : vector<1x4x40xf32> to vector<4x40xf32>
    %cst_82 = arith.constant dense<0.000000e+00> : vector<4x512xf32>
    %85 = tpu.matmul %84, %19, %cst_82 {dimension_numbers = #tpu.dot_dimension_numbers<[1], [0], [0], [1], [0, 0, 1, 1], [], []>} : vector<4x40xf32>, vector<40x512xf32>, vector<4x512xf32> -> vector<4x512xf32>
    %c0_83 = arith.constant 0 : index
    %c128_84 = arith.constant 128 : index
    %86 = vector.load %arg10[%c0_83, %c128_84] : memref<4x768xf32, #tpu.memory_space<vmem>>, vector<4x512xf32>
    tpu.vector_store %arg10[%c0_83, %c128_84], %85 {strides = array<i32>} : memref<4x768xf32, #tpu.memory_space<vmem>>, vector<4x512xf32>,
    %c0_85 = arith.constant 0 : index
    %c144 = arith.constant 144 : index
    %87 = vector.load %arg10[%c0_85, %c144] : memref<4x768xf32, #tpu.memory_space<vmem>>, vector<4x512xf32>
    %c7_86 = arith.constant 7 : index
    %c0_87 = arith.constant 0 : index
    %88 = vector.load %arg6[%c7_86, %c0_87] : memref<9x512xf32, #tpu.memory_space<vmem>>, vector<1x512xf32>
    %89 = vector.broadcast %88 : vector<1x512xf32> to vector<4x512xf32>
    %90 = arith.mulf %87, %89 : vector<4x512xf32>
    %91 = arith.addf %82, %90 : vector<4x512xf32>
    %c8 = arith.constant 8 : index
    %c0_88 = arith.constant 0 : index
    %c0_89 = arith.constant 0 : index
    %92 = vector.load %arg4[%c8, %c0_88, %c0_89] : memref<9x4x40xf32, #tpu.memory_space<vmem>>, vector<1x4x40xf32>
    %93 = vector.shape_cast %92 : vector<1x4x40xf32> to vector<4x40xf32>
    %cst_90 = arith.constant dense<0.000000e+00> : vector<4x512xf32>
    %94 = tpu.matmul %93, %19, %cst_90 {dimension_numbers = #tpu.dot_dimension_numbers<[1], [0], [0], [1], [0, 0, 1, 1], [], []>} : vector<4x40xf32>, vector<40x512xf32>, vector<4x512xf32> -> vector<4x512xf32>
    %c0_91 = arith.constant 0 : index
    %c128_92 = arith.constant 128 : index
    %95 = vector.load %arg10[%c0_91, %c128_92] : memref<4x768xf32, #tpu.memory_space<vmem>>, vector<4x512xf32>
    tpu.vector_store %arg10[%c0_91, %c128_92], %94 {strides = array<i32>} : memref<4x768xf32, #tpu.memory_space<vmem>>, vector<4x512xf32>,
    %c0_93 = arith.constant 0 : index
    %c145 = arith.constant 145 : index
    %96 = vector.load %arg10[%c0_93, %c145] : memref<4x768xf32, #tpu.memory_space<vmem>>, vector<4x512xf32>
    %c8_94 = arith.constant 8 : index
    %c0_95 = arith.constant 0 : index
    %97 = vector.load %arg6[%c8_94, %c0_95] : memref<9x512xf32, #tpu.memory_space<vmem>>, vector<1x512xf32>
    %98 = vector.broadcast %97 : vector<1x512xf32> to vector<4x512xf32>
    %99 = arith.mulf %96, %98 : vector<4x512xf32>
    %100 = arith.addf %91, %99 : vector<4x512xf32>
    %cst_96 = arith.constant dense<0.000000e+00> : vector<4xf32>
    %101 = vector.multi_reduction <add>, %100, %cst_96 [1] : vector<4x512xf32> to vector<4xf32>
    %102 = vector.shape_cast %101 : vector<4xf32> to vector<4x1xf32>
    %103 = arith.mulf %100, %100 : vector<4x512xf32>
    %cst_97 = arith.constant dense<0.000000e+00> : vector<4xf32>
    %104 = vector.multi_reduction <add>, %103, %cst_97 [1] : vector<4x512xf32> to vector<4xf32>
    %105 = vector.shape_cast %104 : vector<4xf32> to vector<4x1xf32>
    %cst_98 = arith.constant 0.001953125 : f32
    %106 = vector.broadcast %cst_98 : f32 to vector<4x1xf32>
    %107 = arith.mulf %102, %106 : vector<4x1xf32>
    %cst_99 = arith.constant 0.001953125 : f32
    %108 = vector.broadcast %cst_99 : f32 to vector<4x1xf32>
    %109 = arith.mulf %105, %108 : vector<4x1xf32>
    %110 = arith.mulf %107, %107 : vector<4x1xf32>
    %111 = arith.subf %109, %110 : vector<4x1xf32>
    %c0_100 = arith.constant 0 : index
    %c0_101 = arith.constant 0 : index
    %112 = vector.load %arg7[%c0_100, %c0_101] : memref<8x1xf32, #tpu.memory_space<vmem>>, vector<4x1xf32>
    %c4_102 = arith.constant 4 : index
    %c0_103 = arith.constant 0 : index
    %113 = vector.load %arg7[%c4_102, %c0_103] : memref<8x1xf32, #tpu.memory_space<vmem>>, vector<4x1xf32>
    %114 = vector.broadcast %107 : vector<4x1xf32> to vector<4x512xf32>
    %115 = arith.subf %100, %114 : vector<4x512xf32>
    %cst_104 = arith.constant 9.99999974E-6 : f32
    %116 = vector.broadcast %cst_104 : f32 to vector<4x1xf32>
    %117 = arith.addf %111, %116 : vector<4x1xf32>
    %118 = math.rsqrt %117 : vector<4x1xf32>
    %119 = vector.broadcast %118 : vector<4x1xf32> to vector<4x512xf32>
    %120 = arith.mulf %115, %119 : vector<4x512xf32>
    %121 = vector.broadcast %112 : vector<4x1xf32> to vector<4x512xf32>
    %122 = arith.mulf %120, %121 : vector<4x512xf32>
    %123 = vector.broadcast %113 : vector<4x1xf32> to vector<4x512xf32>
    %124 = arith.addf %122, %123 : vector<4x512xf32>
    %c4_105 = arith.constant 4 : index
    %c0_106 = arith.constant 0 : index
    %125 = vector.load %arg8[%c4_105, %c0_106] : memref<8x512xf32, #tpu.memory_space<vmem>>, vector<4x512xf32>
    tpu.vector_store %arg8[%c4_105, %c0_106], %124 {strides = array<i32>} : memref<8x512xf32, #tpu.memory_space<vmem>>, vector<4x512xf32>,
    return
  }
}

</mosaic_0001>

<llo_original>
// kernel: tpu_custom_call.1
$region0: #{tpu_custom_call.1}
  #allocation0 [shape = 'u32[]', space=smem, size = 0x4, offset = 0x4, fixed_abs, tag = 'smem constant byte address 0x4 - core index']
  #allocation1 [shape = 'u32[144,128]{1,0:T(1,128)}', space=vmem, size = 0x12000, scoped, tag = 'internal scratch']
  #allocation2 [shape = 'f32[40,128]{1,0:T(8,128)}', space=vmem, size = 0x5000, scoped, tag = 'scratch operand']
  #allocation3 [shape = 'f32[4,768]{1,0:T(4,128)}', space=vmem, size = 0x3000, scoped, tag = 'scratch operand']
  %s0 = inlined_call_operand.hbm [shape: f32[4,512], index: 0, kind: input, shape index: {}]
  %s1 = inlined_call_operand.hbm [shape: f32[64,128], index: 1, kind: input, shape index: {}]
  %s2 = inlined_call_operand.vmem [shape: f32[1,128], index: 2, kind: input, shape index: {}]
  %s3 = inlined_call_operand.hbm [shape: f32[32,64], index: 3, kind: input, shape index: {}]
  %s4 = inlined_call_operand.hbm [shape: f32[9,4,40], index: 4, kind: input, shape index: {}]
  %s5 = inlined_call_operand.hbm [shape: f32[128,512], index: 5, kind: input, shape index: {}]
  %s6 = inlined_call_operand.hbm [shape: f32[9,512], index: 6, kind: input, shape index: {}]
  %s7 = inlined_call_operand.vmem [shape: f32[8,1], index: 7, kind: input, shape index: {}]
  %s8 = inlined_call_operand.hbm [shape: f32[8,512], index: 8, kind: output, shape index: {}]
  %s9 = sld [smem:[#allocation0]]
  $region66: #{tpu_custom_call.1} parent=0
    _
  %s11 = ssub.s32 1, %s9
  %s12 = scalar_select 0, %s11, %s9
  $region1: #{tpu_custom_call.1} parent=0
    #allocation4 [shape = 'u8[8192]{0}', space=vmem, size = 0x2000, scoped, tag = 'input window, operand 0, single buffered']
    #allocation5 [shape = 's32[1]{0}', space=sflag, size = 0x4, scoped, tag = 'scoped memory for tpu_custom_call.1']
    #allocation6 [shape = 's32[1]{0}', space=sflag, size = 0x4, scoped, tag = 'scoped memory for tpu_custom_call.1']
    #allocation7 [shape = 'u8[32768]{0}', space=vmem, size = 0x8000, scoped, tag = 'input window, operand 1, single buffered']
    #allocation8 [shape = 's32[1]{0}', space=sflag, size = 0x4, scoped, tag = 'scoped memory for tpu_custom_call.1']
    #allocation9 [shape = 'u8[16384]{0}', space=vmem, size = 0x4000, scoped, tag = 'input window, operand 3, single buffered']
    #allocation10 [shape = 'u8[18432]{0}', space=vmem, size = 0x4800, scoped, tag = 'input window, operand 4, single buffered']
    #allocation11 [shape = 's32[1]{0}', space=sflag, size = 0x4, scoped, tag = 'scoped memory for tpu_custom_call.1']
    #allocation12 [shape = 'u8[262144]{0}', space=vmem, size = 0x40000, scoped, tag = 'input window, operand 5, single buffered']
    #allocation13 [shape = 'u8[32768]{0}', space=vmem, size = 0x8000, scoped, tag = 'input window, operand 6, single buffered']
    #allocation14 [shape = 's32[1]{0}', space=sflag, size = 0x4, scoped, tag = 'scoped memory for tpu_custom_call.1']
    #allocation15 [shape = 'u8[16384]{0}', space=vmem, size = 0x4000, scoped, tag = 'output window, operand 0, single buffered']
    %13 = vsyncpa [#allocation5], 0
    %14 = vsyncpa [#allocation8], 0
    %15 = vsyncpa [#allocation11], 0
    %16 = vsyncpa [#allocation14], 0
    %17 = vsyncpa [#allocation6], 0
    // Predicated region
    $region2: #{tpu_custom_call.1} parent=1 // pred_check
      _
    $region3: #{tpu_custom_call.1} parent=1 // pred_check_branch
      %19 = sbr.rel (0) target = $region5
    $region4: #{tpu_custom_call.1} parent=1 // pred_region
      %s21 = ssub.s32 256, 256
      %22 = vsyncadd [#allocation5], %s21
      %s24 = sshll.u32 [#allocation4], 4
      %s25 = int_to_ptr.vmem [resolvable:$true] %s24
      %27 = dma.hbm_to_vmem [thread:$0]  %s0, 256, %s25, [#allocation5]
    $region5: #{tpu_custom_call.1} parent=1 // pred_fallthru
      _
    // Predicated region
    $region6: #{tpu_custom_call.1} parent=1 // pred_check
      _
    $region7: #{tpu_custom_call.1} parent=1 // pred_check_branch
      %29 = sbr.rel (0) target = $region9
    $region8: #{tpu_custom_call.1} parent=1 // pred_region
      %s31 = ssub.s32 1024, 1024
      %32 = vsyncadd [#allocation8], %s31
      %s33 = sshll.u32 [#allocation7], 4
      %s34 = int_to_ptr.vmem [resolvable:$true] %s33
      %39 = dma.hbm_to_vmem [thread:$0]  %s1, 1024, %s34, [#allocation8], 128, 128, 8
    $region9: #{tpu_custom_call.1} parent=1 // pred_fallthru
      _
    // Predicated region
    $region10: #{tpu_custom_call.1} parent=1 // pred_check
      _
    $region11: #{tpu_custom_call.1} parent=1 // pred_check_branch
      %41 = sbr.rel (0) target = $region13
    $region12: #{tpu_custom_call.1} parent=1 // pred_region
      _
    $region13: #{tpu_custom_call.1} parent=1 // pred_fallthru
      _
    // Predicated region
    $region14: #{tpu_custom_call.1} parent=1 // pred_check
      _
    $region15: #{tpu_custom_call.1} parent=1 // pred_check_branch
      %43 = sbr.rel (0) target = $region17
    $region16: #{tpu_custom_call.1} parent=1 // pred_region
      %s45 = ssub.s32 512, 512
      %46 = vsyncadd [#allocation8], %s45
      %s47 = sshll.u32 [#allocation9], 4
      %s48 = int_to_ptr.vmem [resolvable:$true] %s47
      %53 = dma.hbm_to_vmem [thread:$0]  %s3, 512, %s48, [#allocation8], 128, 128, 8
    $region17: #{tpu_custom_call.1} parent=1 // pred_fallthru
      _
    // Predicated region
    $region18: #{tpu_custom_call.1} parent=1 // pred_check
      _
    $region19: #{tpu_custom_call.1} parent=1 // pred_check_branch
      %55 = sbr.rel (0) target = $region21
    $region20: #{tpu_custom_call.1} parent=1 // pred_region
      %s57 = ssub.s32 576, 576
      %58 = vsyncadd [#allocation11], %s57
      %s59 = sshll.u32 [#allocation10], 4
      %s60 = int_to_ptr.vmem [resolvable:$true] %s59
      %65 = dma.hbm_to_vmem [thread:$0]  %s4, 576, %s60, [#allocation11], 64, 64, 4
    $region21: #{tpu_custom_call.1} parent=1 // pred_fallthru
      _
    // Predicated region
    $region22: #{tpu_custom_call.1} parent=1 // pred_check
      _
    $region23: #{tpu_custom_call.1} parent=1 // pred_check_branch
      %67 = sbr.rel (0) target = $region25
    $region24: #{tpu_custom_call.1} parent=1 // pred_region
      %s69 = ssub.s32 8192, 8192
      %70 = vsyncadd [#allocation11], %s69
      %s71 = sshll.u32 [#allocation12], 4
      %s72 = int_to_ptr.vmem [resolvable:$true] %s71
      %77 = dma.hbm_to_vmem [thread:$0]  %s5, 8192, %s72, [#allocation11], 512, 512, 32
    $region25: #{tpu_custom_call.1} parent=1 // pred_fallthru
      _
    // Predicated region
    $region26: #{tpu_custom_call.1} parent=1 // pred_check
      _
    $region27: #{tpu_custom_call.1} parent=1 // pred_check_branch
      %79 = sbr.rel (0) target = $region29
    $region28: #{tpu_custom_call.1} parent=1 // pred_region
      %s81 = ssub.s32 1024, 1024
      %82 = vsyncadd [#allocation14], %s81
      %s83 = sshll.u32 [#allocation13], 4
      %s84 = int_to_ptr.vmem [resolvable:$true] %s83
      %89 = dma.hbm_to_vmem [thread:$0]  %s6, 1024, %s84, [#allocation14], 512, 512, 32
    $region29: #{tpu_custom_call.1} parent=1 // pred_fallthru
      _
    // Predicated region
    $region30: #{tpu_custom_call.1} parent=1 // pred_check
      _
    $region31: #{tpu_custom_call.1} parent=1 // pred_check_branch
      %91 = sbr.rel (0) target = $region33
    $region32: #{tpu_custom_call.1} parent=1 // pred_region
      _
    $region33: #{tpu_custom_call.1} parent=1 // pred_fallthru
      _
    // Predicated region
    $region34: #{tpu_custom_call.1} parent=1 // pred_check
      _
    $region35: #{tpu_custom_call.1} parent=1 // pred_check_branch
      %93 = sbr.rel (0) target = $region37
    $region36: #{tpu_custom_call.1} parent=1 // pred_region
      %94 = dma.done [#allocation5], 256
    $region37: #{tpu_custom_call.1} parent=1 // pred_fallthru
      _
    // Predicated region
    $region38: #{tpu_custom_call.1} parent=1 // pred_check
      _
    $region39: #{tpu_custom_call.1} parent=1 // pred_check_branch
      %96 = sbr.rel (0) target = $region41
    $region40: #{tpu_custom_call.1} parent=1 // pred_region
      %97 = dma.done [#allocation8], 1024
    $region41: #{tpu_custom_call.1} parent=1 // pred_fallthru
      _
    // Predicated region
    $region42: #{tpu_custom_call.1} parent=1 // pred_check
      _
    $region43: #{tpu_custom_call.1} parent=1 // pred_check_branch
      %99 = sbr.rel (0) target = $region45
    $region44: #{tpu_custom_call.1} parent=1 // pred_region
      %100 = dma.done [#allocation8], 512
    $region45: #{tpu_custom_call.1} parent=1 // pred_fallthru
      _
    // Predicated region
    $region46: #{tpu_custom_call.1} parent=1 // pred_check
      _
    $region47: #{tpu_custom_call.1} parent=1 // pred_check_branch
      %102 = sbr.rel (0) target = $region49
    $region48: #{tpu_custom_call.1} parent=1 // pred_region
      %103 = dma.done [#allocation11], 576
    $region49: #{tpu_custom_call.1} parent=1 // pred_fallthru
      _
    // Predicated region
    $region50: #{tpu_custom_call.1} parent=1 // pred_check
      _
    $region51: #{tpu_custom_call.1} parent=1 // pred_check_branch
      %105 = sbr.rel (0) target = $region53
    $region52: #{tpu_custom_call.1} parent=1 // pred_region
      %106 = dma.done [#allocation11], 8192
    $region53: #{tpu_custom_call.1} parent=1 // pred_fallthru
      _
    // Predicated region
    $region54: #{tpu_custom_call.1} parent=1 // pred_check
      _
    $region55: #{tpu_custom_call.1} parent=1 // pred_check_branch
      %108 = sbr.rel (0) target = $region57
    $region56: #{tpu_custom_call.1} parent=1 // pred_region
      %109 = dma.done [#allocation14], 1024
    $region57: #{tpu_custom_call.1} parent=1 // pred_fallthru
      _
    %v110 = vld [vmem:[#allocation4] sm:$0xff]
    %v111 = vld [vmem:[#allocation4 + $0x8] sm:$0xff]
    %v114 = vcombine.high %v110, %v110
    %v115 = vcombine.high %v111, %v111
    %118 = vst [vmem:[#allocation15] sm:$0xf] %v110
    %119 = vst [vmem:[#allocation15 + $0x8] sm:$0xf] %v114
    %120 = vst [vmem:[#allocation15 + $0x10] sm:$0xf] %v111
    %121 = vst [vmem:[#allocation15 + $0x18] sm:$0xf] %v115
    %v122 = vld [vmem:[#allocation7] sm:$0xff]
    %v123 = vld [vmem:[#allocation7 + $0x8] sm:$0xff]
    %v124 = vld [vmem:[#allocation7 + $0x10] sm:$0xff]
    %v125 = vld [vmem:[#allocation7 + $0x18] sm:$0xff]
    %v126 = vld [vmem:[#allocation7 + $0x20] sm:$0xff]
    %v127 = vld [vmem:[#allocation7 + $0x28] sm:$0xff]
    %v128 = vld [vmem:[#allocation7 + $0x30] sm:$0xff]
    %v129 = vld [vmem:[#allocation7 + $0x38] sm:$0xff]
    %vm130 = vcmp.gt.f32.partialorder %v122, 0.0
    %vm131 = vcmp.gt.f32.partialorder %v123, 0.0
    %vm132 = vcmp.gt.f32.partialorder %v124, 0.0
    %vm133 = vcmp.gt.f32.partialorder %v125, 0.0
    %vm134 = vcmp.gt.f32.partialorder %v126, 0.0
    %vm135 = vcmp.gt.f32.partialorder %v127, 0.0
    %vm136 = vcmp.gt.f32.partialorder %v128, 0.0
    %vm137 = vcmp.gt.f32.partialorder %v129, 0.0
    %v138 = vmul.f32 %v122, 0.2
    %v139 = vmul.f32 %v123, 0.2
    %v140 = vmul.f32 %v124, 0.2
    %v141 = vmul.f32 %v125, 0.2
    %v142 = vmul.f32 %v126, 0.2
    %v143 = vmul.f32 %v127, 0.2
    %v144 = vmul.f32 %v128, 0.2
    %v145 = vmul.f32 %v129, 0.2
    %v146 = vsel %vm130, %v122, %v138
    %v147 = vsel %vm131, %v123, %v139
    %v148 = vsel %vm132, %v124, %v140
    %v149 = vsel %vm133, %v125, %v141
    %v150 = vsel %vm134, %v126, %v142
    %v151 = vsel %vm135, %v127, %v143
    %v152 = vsel %vm136, %v128, %v144
    %v153 = vsel %vm137, %v129, %v145
    %v154 = vld [vmem:[#allocation9] sm:$0xff]
    %v155 = vld [vmem:[#allocation9 + $0x8] sm:$0xff]
    %v156 = vld [vmem:[#allocation9 + $0x10] sm:$0xff]
    %v157 = vld [vmem:[#allocation9 + $0x18] sm:$0xff]
    %vm158 = vcmask 523264
    %v160 = vsel %vm158, %v154, 0
    %v163 = vsel %vm158, %v155, 0
    %v166 = vsel %vm158, %v156, 0
    %v169 = vsel %vm158, %v157, 0
    %171 = vmatprep.subr.mxu0 0.0
    %172 = vmatpush1.msra.mxu0 0.0
    %173 = vmatprep.subr.mxu0 0.0
    %174 = vmatpush1.msra.mxu0 0.0
    %175 = vmatprep.subr.mxu0 0.0
    %176 = vmatpush1.msra.mxu0 0.0
    %177 = vmatprep.subr.mxu0 0.0
    %178 = vmatpush1.msra.mxu0 0.0
    %179 = vmatprep.subr.mxu0 0.0
    %180 = vmatpush1.msra.mxu0 0.0
    %181 = vmatprep.subr.mxu0 0.0
    %182 = vmatpush1.msra.mxu0 0.0
    %183 = vmatprep.subr.mxu0 0.0
    %184 = vmatpush1.msra.mxu0 0.0
    %185 = vmatprep.subr.mxu0 0.0
    %186 = vmatpush1.msra.mxu0 0.0
    %187 = vmatprep.subr.mxu0 0.0
    %188 = vmatpush1.msra.mxu0 %v153
    %189 = vmatprep.subr.mxu0 0.0
    %190 = vmatpush1.msra.mxu0 %v152
    %191 = vmatprep.subr.mxu0 0.0
    %192 = vmatpush1.msra.mxu0 %v151
    %193 = vmatprep.subr.mxu0 0.0
    %194 = vmatpush1.msra.mxu0 %v150
    %195 = vmatprep.subr.mxu0 0.0
    %196 = vmatpush1.msra.mxu0 %v149
    %197 = vmatprep.subr.mxu0 0.0
    %198 = vmatpush1.msra.mxu0 %v148
    %199 = vmatprep.subr.mxu0 0.0
    %200 = vmatpush1.msra.mxu0 %v147
    %201 = vmatprep.subr.mxu0 0.0
    %202 = vmatpush1.msra.mxu0 %v146
    %203 = vmatprep.subr.mxu0 0.0
    %204 = vmatpush2.msra.mxu0 0.0
    %205 = vmatprep.subr.mxu0 0.0
    %206 = vmatpush2.msra.mxu0 0.0
    %207 = vmatprep.subr.mxu0 0.0
    %208 = vmatpush2.msra.mxu0 0.0
    %209 = vmatprep.subr.mxu0 0.0
    %210 = vmatpush2.msra.mxu0 0.0
    %211 = vmatprep.subr.mxu0 0.0
    %212 = vmatpush2.msra.mxu0 0.0
    %213 = vmatprep.subr.mxu0 0.0
    %214 = vmatpush2.msra.mxu0 0.0
    %215 = vmatprep.subr.mxu0 0.0
    %216 = vmatpush2.msra.mxu0 0.0
    %217 = vmatprep.subr.mxu0 0.0
    %218 = vmatpush2.msra.mxu0 0.0
    %219 = vmatprep.subr.mxu0 0.0
    %220 = vmatpush2.msra.mxu0 0.0
    %221 = vmatprep.subr.mxu0 0.0
    %222 = vmatpush2.msra.mxu0 0.0
    %223 = vmatprep.subr.mxu0 0.0
    %224 = vmatpush2.msra.mxu0 0.0
    %225 = vmatprep.subr.mxu0 0.0
    %226 = vmatpush2.msra.mxu0 0.0
    %227 = vmatprep.subr.mxu0 0.0
    %228 = vmatpush2.msra.mxu0 0.0
    %229 = vmatprep.subr.mxu0 0.0
    %230 = vmatpush2.msra.mxu0 0.0
    %231 = vmatprep.subr.mxu0 0.0
    %232 = vmatpush2.msra.mxu0 0.0
    %233 = vmatprep.subr.mxu0 0.0
    %234 = vmatpush2.msra.mxu0 0.0
    %235 = vmatprep.mubr.f32.mxu0 0.0
    %236 = vmatmul.mubr.f32.gmra.mxu0 %v160
    %v237 = vpop.f32.mrf.mxu0
    %v238 = vadd.f32 0.0, %v237
    %v239 = vpop.f32.mrf.mxu0
    %240 = vmatprep.mubr.f32.mxu0 0.0
    %241 = vmatmul.mubr.f32.gmra.mxu0 %v163
    %v242 = vpop.f32.mrf.mxu0
    %v243 = vadd.f32 0.0, %v242
    %v244 = vpop.f32.mrf.mxu0
    %245 = vmatprep.mubr.f32.mxu0 0.0
    %246 = vmatmul.mubr.f32.gmra.mxu0 %v166
    %v247 = vpop.f32.mrf.mxu0
    %v248 = vadd.f32 0.0, %v247
    %v249 = vpop.f32.mrf.mxu0
    %250 = vmatprep.mubr.f32.mxu0 0.0
    %251 = vmatmul.mubr.f32.gmra.mxu0 %v169
    %v252 = vpop.f32.mrf.mxu0
    %v253 = vadd.f32 0.0, %v252
    %v254 = vpop.f32.mrf.mxu0
    %255 = vdwg.mxu0
    %256 = vst [vmem:[#allocation2] sm:$0xff] 0.0
    %257 = vst [vmem:[#allocation2 + $0x8] sm:$0xff] 0.0
    %258 = vst [vmem:[#allocation2 + $0x10] sm:$0xff] 0.0
    %259 = vst [vmem:[#allocation2 + $0x18] sm:$0xff] 0.0
    %260 = vst [vmem:[#allocation2 + $0x20] sm:$0xff] 0.0
    %261 = vst [vmem:[#allocation2] sm:$0xff] %v238
    %262 = vst [vmem:[#allocation2 + $0x8] sm:$0xff] %v243
    %263 = vst [vmem:[#allocation2 + $0x10] sm:$0xff] %v248
    %264 = vst [vmem:[#allocation2 + $0x18] sm:$0xff] %v253
    %v265 = vld [vmem:[%s2] sm:$0x1]
    %266 = vst [vmem:[#allocation2 + $0x20] sm:$0x1] %v265
    %v267 = vld [vmem:[#allocation2] sm:$0xff]
    %v268 = vld [vmem:[#allocation2 + $0x8] sm:$0xff]
    %v269 = vld [vmem:[#allocation2 + $0x10] sm:$0xff]
    %v270 = vld [vmem:[#allocation2 + $0x18] sm:$0xff]
    %v271 = vld [vmem:[#allocation2 + $0x20] sm:$0xff]
    %v272 = vmax.f32 %v267, 0.0
    %v273 = vmax.f32 %v268, 0.0
    %v274 = vmax.f32 %v269, 0.0
    %v275 = vmax.f32 %v270, 0.0
    %v276 = vmax.f32 %v271, 0.0
    %v277 = vld [vmem:[#allocation12] sm:$0xff]
    %v278 = vld [vmem:[#allocation12 + $0x8] sm:$0xff]
    %v279 = vld [vmem:[#allocation12 + $0x10] sm:$0xff]
    %v280 = vld [vmem:[#allocation12 + $0x18] sm:$0xff]
    %v281 = vld [vmem:[#allocation12 + $0x20] sm:$0xff]
    %v282 = vld [vmem:[#allocation12 + $0x28] sm:$0xff]
    %v283 = vld [vmem:[#allocation12 + $0x30] sm:$0xff]
    %v284 = vld [vmem:[#allocation12 + $0x38] sm:$0xff]
    %v285 = vld [vmem:[#allocation12 + $0x40] sm:$0xff]
    %v286 = vld [vmem:[#allocation12 + $0x48] sm:$0xff]
    %v287 = vld [vmem:[#allocation12 + $0x50] sm:$0xff]
    %v288 = vld [vmem:[#allocation12 + $0x58] sm:$0xff]
    %v289 = vld [vmem:[#allocation12 + $0x60] sm:$0xff]
    %v290 = vld [vmem:[#allocation12 + $0x68] sm:$0xff]
    %v291 = vld [vmem:[#allocation12 + $0x70] sm:$0xff]
    %v292 = vld [vmem:[#allocation12 + $0x78] sm:$0xff]
    %v293 = vld [vmem:[#allocation12 + $0x80] sm:$0xff]
    %v294 = vld [vmem:[#allocation12 + $0x88] sm:$0xff]
    %v295 = vld [vmem:[#allocation12 + $0x90] sm:$0xff]
    %v296 = vld [vmem:[#allocation12 + $0x98] sm:$0xff]
    %v297 = vld [vmem:[#allocation12 + $0xa0] sm:$0xff]
    %v298 = vld [vmem:[#allocation12 + $0xa8] sm:$0xff]
    %v299 = vld [vmem:[#allocation12 + $0xb0] sm:$0xff]
    %v300 = vld [vmem:[#allocation12 + $0xb8] sm:$0xff]
    %v301 = vld [vmem:[#allocation12 + $0xc0] sm:$0xff]
    %v302 = vld [vmem:[#allocation12 + $0xc8] sm:$0xff]
    %v303 = vld [vmem:[#allocation12 + $0xd0] sm:$0xff]
    %v304 = vld [vmem:[#allocation12 + $0xd8] sm:$0xff]
    %v305 = vld [vmem:[#allocation12 + $0xe0] sm:$0xff]
    %v306 = vld [vmem:[#allocation12 + $0xe8] sm:$0xff]
    %v307 = vld [vmem:[#allocation12 + $0xf0] sm:$0xff]
    %v308 = vld [vmem:[#allocation12 + $0xf8] sm:$0xff]
    %v309 = vld [vmem:[#allocation12 + $0x100] sm:$0xff]
    %v310 = vld [vmem:[#allocation12 + $0x108] sm:$0xff]
    %v311 = vld [vmem:[#allocation12 + $0x110] sm:$0xff]
    %v312 = vld [vmem:[#allocation12 + $0x118] sm:$0xff]
    %v313 = vld [vmem:[#allocation12 + $0x120] sm:$0xff]
    %v314 = vld [vmem:[#allocation12 + $0x128] sm:$0xff]
    %v315 = vld [vmem:[#allocation12 + $0x130] sm:$0xff]
    %v316 = vld [vmem:[#allocation12 + $0x138] sm:$0xff]
    %v317 = vld [vmem:[#allocation12 + $0x140] sm:$0xff]
    %v318 = vld [vmem:[#allocation12 + $0x148] sm:$0xff]
    %v319 = vld [vmem:[#allocation12 + $0x150] sm:$0xff]
    %v320 = vld [vmem:[#allocation12 + $0x158] sm:$0xff]
    %v321 = vld [vmem:[#allocation12 + $0x160] sm:$0xff]
    %v322 = vld [vmem:[#allocation12 + $0x168] sm:$0xff]
    %v323 = vld [vmem:[#allocation12 + $0x170] sm:$0xff]
    %v324 = vld [vmem:[#allocation12 + $0x178] sm:$0xff]
    %v325 = vld [vmem:[#allocation12 + $0x180] sm:$0xff]
    %v326 = vld [vmem:[#allocation12 + $0x188] sm:$0xff]
    %v327 = vld [vmem:[#allocation12 + $0x190] sm:$0xff]
    %v328 = vld [vmem:[#allocation12 + $0x198] sm:$0xff]
    %v329 = vld [vmem:[#allocation12 + $0x1a0] sm:$0xff]
    %v330 = vld [vmem:[#allocation12 + $0x1a8] sm:$0xff]
    %v331 = vld [vmem:[#allocation12 + $0x1b0] sm:$0xff]
    %v332 = vld [vmem:[#allocation12 + $0x1b8] sm:$0xff]
    %v333 = vld [vmem:[#allocation12 + $0x1c0] sm:$0xff]
    %v334 = vld [vmem:[#allocation12 + $0x1c8] sm:$0xff]
    %v335 = vld [vmem:[#allocation12 + $0x1d0] sm:$0xff]
    %v336 = vld [vmem:[#allocation12 + $0x1d8] sm:$0xff]
    %v337 = vld [vmem:[#allocation12 + $0x1e0] sm:$0xff]
    %v338 = vld [vmem:[#allocation12 + $0x1e8] sm:$0xff]
    %v339 = vld [vmem:[#allocation12 + $0x1f0] sm:$0xff]
    %v340 = vld [vmem:[#allocation12 + $0x1f8] sm:$0xff]
    %341 = vmatprep.subr.mxu0 %v338
    %342 = vmatpush1.msra.mxu0 %v337
    %343 = vmatprep.subr.mxu0 %v334
    %344 = vmatpush1.msra.mxu0 %v333
    %345 = vmatprep.subr.mxu0 %v330
    %346 = vmatpush1.msra.mxu0 %v329
    %347 = vmatprep.subr.mxu0 %v326
    %348 = vmatpush1.msra.mxu0 %v325
    %349 = vmatprep.subr.mxu0 %v322
    %350 = vmatpush1.msra.mxu0 %v321
    %351 = vmatprep.subr.mxu0 %v318
    %352 = vmatpush1.msra.mxu0 %v317
    %353 = vmatprep.subr.mxu0 %v314
    %354 = vmatpush1.msra.mxu0 %v313
    %355 = vmatprep.subr.mxu0 %v310
    %356 = vmatpush1.msra.mxu0 %v309
    %357 = vmatprep.subr.mxu0 %v306
    %358 = vmatpush1.msra.mxu0 %v305
    %359 = vmatprep.subr.mxu0 %v302
    %360 = vmatpush1.msra.mxu0 %v301
    %361 = vmatprep.subr.mxu0 %v298
    %362 = vmatpush1.msra.mxu0 %v297
    %363 = vmatprep.subr.mxu0 %v294
    %364 = vmatpush1.msra.mxu0 %v293
    %365 = vmatprep.subr.mxu0 %v290
    %366 = vmatpush1.msra.mxu0 %v289
    %367 = vmatprep.subr.mxu0 %v286
    %368 = vmatpush1.msra.mxu0 %v285
    %369 = vmatprep.subr.mxu0 %v282
    %370 = vmatpush1.msra.mxu0 %v281
    %371 = vmatprep.subr.mxu0 %v278
    %372 = vmatpush1.msra.mxu0 %v277
    %373 = vmatprep.subr.mxu0 0.0
    %374 = vmatpush2.msra.mxu0 0.0
    %375 = vmatprep.subr.mxu0 0.0
    %376 = vmatpush2.msra.mxu0 0.0
    %377 = vmatprep.subr.mxu0 0.0
    %378 = vmatpush2.msra.mxu0 0.0
    %379 = vmatprep.subr.mxu0 0.0
    %380 = vmatpush2.msra.mxu0 0.0
    %381 = vmatprep.subr.mxu0 0.0
    %382 = vmatpush2.msra.mxu0 0.0
    %383 = vmatprep.subr.mxu0 0.0
    %384 = vmatpush2.msra.mxu0 0.0
    %385 = vmatprep.subr.mxu0 0.0
    %386 = vmatpush2.msra.mxu0 0.0
    %387 = vmatprep.subr.mxu0 0.0
    %388 = vmatpush2.msra.mxu0 0.0
    %389 = vmatprep.subr.mxu0 0.0
    %390 = vmatpush2.msra.mxu0 0.0
    %391 = vmatprep.subr.mxu0 0.0
    %392 = vmatpush2.msra.mxu0 0.0
    %393 = vmatprep.subr.mxu0 0.0
    %394 = vmatpush2.msra.mxu0 0.0
    %395 = vmatprep.subr.mxu0 0.0
    %396 = vmatpush2.msra.mxu0 0.0
    %397 = vmatprep.subr.mxu0 0.0
    %398 = vmatpush2.msra.mxu0 0.0
    %399 = vmatprep.subr.mxu0 0.0
    %400 = vmatpush2.msra.mxu0 0.0
    %401 = vmatprep.subr.mxu0 0.0
    %402 = vmatpush2.msra.mxu0 0.0
    %403 = vmatprep.subr.mxu0 0.0
    %404 = vmatpush2.msra.mxu0 0.0
    %405 = vmatprep.mubr.f32.mxu0 0.0
    %406 = vmatmul.mubr.f32.gmra.mxu0 %v272
    %v407 = vpop.f32.mrf.mxu0
    %v408 = vadd.f32 0.0, %v407
    %v409 = vpop.f32.mrf.mxu0
    %v410 = vadd.f32 0.0, %v409
    %411 = vmatprep.mubr.f32.mxu0 0.0
    %412 = vmatmul.mubr.f32.gmra.mxu0 %v273
    %v413 = vpop.f32.mrf.mxu0
    %v414 = vadd.f32 0.0, %v413
    %v415 = vpop.f32.mrf.mxu0
    %v416 = vadd.f32 0.0, %v415
    %417 = vmatprep.mubr.f32.mxu0 0.0
    %418 = vmatmul.mubr.f32.gmra.mxu0 %v274
    %v419 = vpop.f32.mrf.mxu0
    %v420 = vadd.f32 0.0, %v419
    %v421 = vpop.f32.mrf.mxu0
    %v422 = vadd.f32 0.0, %v421
    %423 = vmatprep.mubr.f32.mxu0 0.0
    %424 = vmatmul.mubr.f32.gmra.mxu0 %v275
    %v425 = vpop.f32.mrf.mxu0
    %v426 = vadd.f32 0.0, %v425
    %v427 = vpop.f32.mrf.mxu0
    %v428 = vadd.f32 0.0, %v427
    %429 = vmatprep.mubr.f32.mxu0 0.0
    %430 = vmatmul.mubr.f32.gmra.mxu0 %v276
    %v431 = vpop.f32.mrf.mxu0
    %v432 = vadd.f32 0.0, %v431
    %v433 = vpop.f32.mrf.mxu0
    %v434 = vadd.f32 0.0, %v433
    %435 = vdwg.mxu0
    %436 = vmatprep.subr.mxu0 %v340
    %437 = vmatpush1.msra.mxu0 %v339
    %438 = vmatprep.subr.mxu0 %v336
    %439 = vmatpush1.msra.mxu0 %v335
    %440 = vmatprep.subr.mxu0 %v332
    %441 = vmatpush1.msra.mxu0 %v331
    %442 = vmatprep.subr.mxu0 %v328
    %443 = vmatpush1.msra.mxu0 %v327
    %444 = vmatprep.subr.mxu0 %v324
    %445 = vmatpush1.msra.mxu0 %v323
    %446 = vmatprep.subr.mxu0 %v320
    %447 = vmatpush1.msra.mxu0 %v319
    %448 = vmatprep.subr.mxu0 %v316
    %449 = vmatpush1.msra.mxu0 %v315
    %450 = vmatprep.subr.mxu0 %v312
    %451 = vmatpush1.msra.mxu0 %v311
    %452 = vmatprep.subr.mxu0 %v308
    %453 = vmatpush1.msra.mxu0 %v307
    %454 = vmatprep.subr.mxu0 %v304
    %455 = vmatpush1.msra.mxu0 %v303
    %456 = vmatprep.subr.mxu0 %v300
    %457 = vmatpush1.msra.mxu0 %v299
    %458 = vmatprep.subr.mxu0 %v296
    %459 = vmatpush1.msra.mxu0 %v295
    %460 = vmatprep.subr.mxu0 %v292
    %461 = vmatpush1.msra.mxu0 %v291
    %462 = vmatprep.subr.mxu0 %v288
    %463 = vmatpush1.msra.mxu0 %v287
    %464 = vmatprep.subr.mxu0 %v284
    %465 = vmatpush1.msra.mxu0 %v283
    %466 = vmatprep.subr.mxu0 %v280
    %467 = vmatpush1.msra.mxu0 %v279
    %468 = vmatprep.subr.mxu0 0.0
    %469 = vmatpush2.msra.mxu0 0.0
    %470 = vmatprep.subr.mxu0 0.0
    %471 = vmatpush2.msra.mxu0 0.0
    %472 = vmatprep.subr.mxu0 0.0
    %473 = vmatpush2.msra.mxu0 0.0
    %474 = vmatprep.subr.mxu0 0.0
    %475 = vmatpush2.msra.mxu0 0.0
    %476 = vmatprep.subr.mxu0 0.0
    %477 = vmatpush2.msra.mxu0 0.0
    %478 = vmatprep.subr.mxu0 0.0
    %479 = vmatpush2.msra.mxu0 0.0
    %480 = vmatprep.subr.mxu0 0.0
    %481 = vmatpush2.msra.mxu0 0.0
    %482 = vmatprep.subr.mxu0 0.0
    %483 = vmatpush2.msra.mxu0 0.0
    %484 = vmatprep.subr.mxu0 0.0
    %485 = vmatpush2.msra.mxu0 0.0
    %486 = vmatprep.subr.mxu0 0.0
    %487 = vmatpush2.msra.mxu0 0.0
    %488 = vmatprep.subr.mxu0 0.0
    %489 = vmatpush2.msra.mxu0 0.0
    %490 = vmatprep.subr.mxu0 0.0
    %491 = vmatpush2.msra.mxu0 0.0
    %492 = vmatprep.subr.mxu0 0.0
    %493 = vmatpush2.msra.mxu0 0.0
    %494 = vmatprep.subr.mxu0 0.0
    %495 = vmatpush2.msra.mxu0 0.0
    %496 = vmatprep.subr.mxu0 0.0
    %497 = vmatpush2.msra.mxu0 0.0
    %498 = vmatprep.subr.mxu0 0.0
    %499 = vmatpush2.msra.mxu0 0.0
    %500 = vmatprep.mubr.f32.mxu0 0.0
    %501 = vmatmul.mubr.f32.gmra.mxu0 %v272
    %v502 = vpop.f32.mrf.mxu0
    %v503 = vadd.f32 0.0, %v502
    %v504 = vpop.f32.mrf.mxu0
    %v505 = vadd.f32 0.0, %v504
    %506 = vmatprep.mubr.f32.mxu0 0.0
    %507 = vmatmul.mubr.f32.gmra.mxu0 %v273
    %v508 = vpop.f32.mrf.mxu0
    %v509 = vadd.f32 0.0, %v508
    %v510 = vpop.f32.mrf.mxu0
    %v511 = vadd.f32 0.0, %v510
    %512 = vmatprep.mubr.f32.mxu0 0.0
    %513 = vmatmul.mubr.f32.gmra.mxu0 %v274
    %v514 = vpop.f32.mrf.mxu0
    %v515 = vadd.f32 0.0, %v514
    %v516 = vpop.f32.mrf.mxu0
    %v517 = vadd.f32 0.0, %v516
    %518 = vmatprep.mubr.f32.mxu0 0.0
    %519 = vmatmul.mubr.f32.gmra.mxu0 %v275
    %v520 = vpop.f32.mrf.mxu0
    %v521 = vadd.f32 0.0, %v520
    %v522 = vpop.f32.mrf.mxu0
    %v523 = vadd.f32 0.0, %v522
    %524 = vmatprep.mubr.f32.mxu0 0.0
    %525 = vmatmul.mubr.f32.gmra.mxu0 %v276
    %v526 = vpop.f32.mrf.mxu0
    %v527 = vadd.f32 0.0, %v526
    %v528 = vpop.f32.mrf.mxu0
    %v529 = vadd.f32 0.0, %v528
    %530 = vdwg.mxu0
    %531 = vst [vmem:[#allocation3] sm:$0xf] 0.0
    %532 = vst [vmem:[#allocation3 + $0x14] sm:$0xf] 0.0
    %v533 = vld [vmem:[#allocation10] sm:$0xf]
    %vm534 = vcmask 326656
    %v536 = vsel %vm534, %v533, 0
    %538 = vmatprep.subr.mxu0 0.0
    %539 = vmatpush1.msra.mxu0 0.0
    %540 = vmatprep.subr.mxu0 0.0
    %541 = vmatpush1.msra.mxu0 0.0
    %542 = vmatprep.subr.mxu0 0.0
    %543 = vmatpush1.msra.mxu0 0.0
    %544 = vmatprep.subr.mxu0 0.0
    %545 = vmatpush1.msra.mxu0 0.0
    %546 = vmatprep.subr.mxu0 0.0
    %547 = vmatpush1.msra.mxu0 0.0
    %548 = vmatprep.subr.mxu0 0.0
    %549 = vmatpush1.msra.mxu0 0.0
    %550 = vmatprep.subr.mxu0 0.0
    %551 = vmatpush1.msra.mxu0 0.0
    %552 = vmatprep.subr.mxu0 0.0
    %553 = vmatpush1.msra.mxu0 0.0
    %554 = vmatprep.subr.mxu0 0.0
    %555 = vmatpush1.msra.mxu0 0.0
    %556 = vmatprep.subr.mxu0 0.0
    %557 = vmatpush1.msra.mxu0 0.0
    %558 = vmatprep.subr.mxu0 0.0
    %559 = vmatpush1.msra.mxu0 0.0
    %560 = vmatprep.subr.mxu0 %v434
    %561 = vmatpush1.msra.mxu0 %v432
    %562 = vmatprep.subr.mxu0 %v428
    %563 = vmatpush1.msra.mxu0 %v426
    %564 = vmatprep.subr.mxu0 %v422
    %565 = vmatpush1.msra.mxu0 %v420
    %566 = vmatprep.subr.mxu0 %v416
    %567 = vmatpush1.msra.mxu0 %v414
    %568 = vmatprep.subr.mxu0 %v410
    %569 = vmatpush1.msra.mxu0 %v408
    %570 = vmatprep.subr.mxu0 0.0
    %571 = vmatpush2.msra.mxu0 0.0
    %572 = vmatprep.subr.mxu0 0.0
    %573 = vmatpush2.msra.mxu0 0.0
    %574 = vmatprep.subr.mxu0 0.0
    %575 = vmatpush2.msra.mxu0 0.0
    %576 = vmatprep.subr.mxu0 0.0
    %577 = vmatpush2.msra.mxu0 0.0
    %578 = vmatprep.subr.mxu0 0.0
    %579 = vmatpush2.msra.mxu0 0.0
    %580 = vmatprep.subr.mxu0 0.0
    %581 = vmatpush2.msra.mxu0 0.0
    %582 = vmatprep.subr.mxu0 0.0
    %583 = vmatpush2.msra.mxu0 0.0
    %584 = vmatprep.subr.mxu0 0.0
    %585 = vmatpush2.msra.mxu0 0.0
    %586 = vmatprep.subr.mxu0 0.0
    %587 = vmatpush2.msra.mxu0 0.0
    %588 = vmatprep.subr.mxu0 0.0
    %589 = vmatpush2.msra.mxu0 0.0
    %590 = vmatprep.subr.mxu0 0.0
    %591 = vmatpush2.msra.mxu0 0.0
    %592 = vmatprep.subr.mxu0 0.0
    %593 = vmatpush2.msra.mxu0 0.0
    %594 = vmatprep.subr.mxu0 0.0
    %595 = vmatpush2.msra.mxu0 0.0
    %596 = vmatprep.subr.mxu0 0.0
    %597 = vmatpush2.msra.mxu0 0.0
    %598 = vmatprep.subr.mxu0 0.0
    %599 = vmatpush2.msra.mxu0 0.0
    %600 = vmatprep.subr.mxu0 0.0
    %601 = vmatpush2.msra.mxu0 0.0
    %602 = vmatprep.mubr.f32.mxu0 0.0
    %603 = vmatmul.mubr.f32.gmra.mxu0 %v536
    %v604 = vpop.f32.mrf.mxu0
    %v605 = vadd.f32 0.0, %v604
    %v606 = vpop.f32.mrf.mxu0
    %v607 = vadd.f32 0.0, %v606
    %608 = vdwg.mxu0
    %609 = vmatprep.subr.mxu0 0.0
    %610 = vmatpush1.msra.mxu0 0.0
    %611 = vmatprep.subr.mxu0 0.0
    %612 = vmatpush1.msra.mxu0 0.0
    %613 = vmatprep.subr.mxu0 0.0
    %614 = vmatpush1.msra.mxu0 0.0
    %615 = vmatprep.subr.mxu0 0.0
    %616 = vmatpush1.msra.mxu0 0.0
    %617 = vmatprep.subr.mxu0 0.0
    %618 = vmatpush1.msra.mxu0 0.0
    %619 = vmatprep.subr.mxu0 0.0
    %620 = vmatpush1.msra.mxu0 0.0
    %621 = vmatprep.subr.mxu0 0.0
    %622 = vmatpush1.msra.mxu0 0.0
    %623 = vmatprep.subr.mxu0 0.0
    %624 = vmatpush1.msra.mxu0 0.0
    %625 = vmatprep.subr.mxu0 0.0
    %626 = vmatpush1.msra.mxu0 0.0
    %627 = vmatprep.subr.mxu0 0.0
    %628 = vmatpush1.msra.mxu0 0.0
    %629 = vmatprep.subr.mxu0 0.0
    %630 = vmatpush1.msra.mxu0 0.0
    %631 = vmatprep.subr.mxu0 %v529
    %632 = vmatpush1.msra.mxu0 %v527
    %633 = vmatprep.subr.mxu0 %v523
    %634 = vmatpush1.msra.mxu0 %v521
    %635 = vmatprep.subr.mxu0 %v517
    %636 = vmatpush1.msra.mxu0 %v515
    %637 = vmatprep.subr.mxu0 %v511
    %638 = vmatpush1.msra.mxu0 %v509
    %639 = vmatprep.subr.mxu0 %v505
    %640 = vmatpush1.msra.mxu0 %v503
    %641 = vmatprep.subr.mxu0 0.0
    %642 = vmatpush2.msra.mxu0 0.0
    %643 = vmatprep.subr.mxu0 0.0
    %644 = vmatpush2.msra.mxu0 0.0
    %645 = vmatprep.subr.mxu0 0.0
    %646 = vmatpush2.msra.mxu0 0.0
    %647 = vmatprep.subr.mxu0 0.0
    %648 = vmatpush2.msra.mxu0 0.0
    %649 = vmatprep.subr.mxu0 0.0
    %650 = vmatpush2.msra.mxu0 0.0
    %651 = vmatprep.subr.mxu0 0.0
    %652 = vmatpush2.msra.mxu0 0.0
    %653 = vmatprep.subr.mxu0 0.0
    %654 = vmatpush2.msra.mxu0 0.0
    %655 = vmatprep.subr.mxu0 0.0
    %656 = vmatpush2.msra.mxu0 0.0
    %657 = vmatprep.subr.mxu0 0.0
    %658 = vmatpush2.msra.mxu0 0.0
    %659 = vmatprep.subr.mxu0 0.0
    %660 = vmatpush2.msra.mxu0 0.0
    %661 = vmatprep.subr.mxu0 0.0
    %662 = vmatpush2.msra.mxu0 0.0
    %663 = vmatprep.subr.mxu0 0.0
    %664 = vmatpush2.msra.mxu0 0.0
    %665 = vmatprep.subr.mxu0 0.0
    %666 = vmatpush2.msra.mxu0 0.0
    %667 = vmatprep.subr.mxu0 0.0
    %668 = vmatpush2.msra.mxu0 0.0
    %669 = vmatprep.subr.mxu0 0.0
    %670 = vmatpush2.msra.mxu0 0.0
    %671 = vmatprep.subr.mxu0 0.0
    %672 = vmatpush2.msra.mxu0 0.0
    %673 = vmatprep.mubr.f32.mxu0 0.0
    %674 = vmatmul.mubr.f32.gmra.mxu0 %v536
    %v675 = vpop.f32.mrf.mxu0
    %v676 = vadd.f32 0.0, %v675
    %v677 = vpop.f32.mrf.mxu0
    %v678 = vadd.f32 0.0, %v677
    %679 = vdwg.mxu0
    %v684 = vcombine.low %v605, %v607
    %v685 = vcombine.low %v676, %v678
    %688 = vst [vmem:[#allocation3 + $0x4] sm:$0xff] %v684
    %689 = vst [vmem:[#allocation3 + $0xc] sm:$0xff] %v685
    %v690 = vld [vmem:[#allocation3] sm:$0xff]
    %v691 = vld [vmem:[#allocation3 + $0x8] sm:$0xff]
    %v692 = vld [vmem:[#allocation3 + $0x10] sm:$0xf]
    %v693 = vld [vmem:[#allocation13] ss:$8 sm:$0xf]
    %v695 = vlaneseq
    %v696 = vshrl.u32 %v695, 7
    %v697 = vsub.s32 0, %v696
    %v698 = vrot.slane %v693, %v697
    %v699 = vlaneseq
    %v700 = vshrl.u32 %v699, 7
    %v701 = vsub.s32 1, %v700
    %v702 = vrot.slane %v693, %v701
    %v703 = vlaneseq
    %v704 = vshrl.u32 %v703, 7
    %v705 = vsub.s32 2, %v704
    %v706 = vrot.slane %v693, %v705
    %v707 = vlaneseq
    %v708 = vshrl.u32 %v707, 7
    %v709 = vsub.s32 3, %v708
    %v710 = vrot.slane %v693, %v709
    %v711 = vcombine.low %v698, %v702
    %v712 = vcombine.low %v706, %v710
    %713 = vrot.lane.b32.xlu0 %v711, 111
    %v714 = vpop.permute.xlu0 %713
    %715 = vrot.lane.b32.xlu0 %v712, 111
    %v716 = vpop.permute.xlu0 %715
    %v717 = vrot.slane %v714, 4
    %v718 = vrot.slane %v716, 4
    %vm719 = vcmask 908288
    %v720 = vsel %vm719, %v717, %v714
    %vm721 = vcmask 1043456
    %v722 = vsel %vm721, %v717, %v718
    %v723 = vsel %vm719, %v722, %v716
    %v727 = vmul.f32 %v690, %v720
    %v728 = vmul.f32 %v691, %v723
    %v729 = vmul.f32 %v692, %v718
    %v730 = vadd.f32 %v727, 0.0
    %v731 = vadd.f32 %v728, 0.0
    %v732 = vadd.f32 %v729, 0.0
    %s733 = scalar_lea.vmem [#allocation10], 4
    %v734 = vld [vmem:[%s733] sm:$0xf]
    %v736 = vsel %vm534, %v734, 0
    %738 = vmatprep.subr.mxu0 0.0
    %739 = vmatpush1.msra.mxu0 0.0
    %740 = vmatprep.subr.mxu0 0.0
    %741 = vmatpush1.msra.mxu0 0.0
    %742 = vmatprep.subr.mxu0 0.0
    %743 = vmatpush1.msra.mxu0 0.0
    %744 = vmatprep.subr.mxu0 0.0
    %745 = vmatpush1.msra.mxu0 0.0
    %746 = vmatprep.subr.mxu0 0.0
    %747 = vmatpush1.msra.mxu0 0.0
    %748 = vmatprep.subr.mxu0 0.0
    %749 = vmatpush1.msra.mxu0 0.0
    %750 = vmatprep.subr.mxu0 0.0
    %751 = vmatpush1.msra.mxu0 0.0
    %752 = vmatprep.subr.mxu0 0.0
    %753 = vmatpush1.msra.mxu0 0.0
    %754 = vmatprep.subr.mxu0 0.0
    %755 = vmatpush1.msra.mxu0 0.0
    %756 = vmatprep.subr.mxu0 0.0
    %757 = vmatpush1.msra.mxu0 0.0
    %758 = vmatprep.subr.mxu0 0.0
    %759 = vmatpush1.msra.mxu0 0.0
    %760 = vmatprep.subr.mxu0 %v434
    %761 = vmatpush1.msra.mxu0 %v432
    %762 = vmatprep.subr.mxu0 %v428
    %763 = vmatpush1.msra.mxu0 %v426
    %764 = vmatprep.subr.mxu0 %v422
    %765 = vmatpush1.msra.mxu0 %v420
    %766 = vmatprep.subr.mxu0 %v416
    %767 = vmatpush1.msra.mxu0 %v414
    %768 = vmatprep.subr.mxu0 %v410
    %769 = vmatpush1.msra.mxu0 %v408
    %770 = vmatprep.subr.mxu0 0.0
    %771 = vmatpush2.msra.mxu0 0.0
    %772 = vmatprep.subr.mxu0 0.0
    %773 = vmatpush2.msra.mxu0 0.0
    %774 = vmatprep.subr.mxu0 0.0
    %775 = vmatpush2.msra.mxu0 0.0
    %776 = vmatprep.subr.mxu0 0.0
    %777 = vmatpush2.msra.mxu0 0.0
    %778 = vmatprep.subr.mxu0 0.0
    %779 = vmatpush2.msra.mxu0 0.0
    %780 = vmatprep.subr.mxu0 0.0
    %781 = vmatpush2.msra.mxu0 0.0
    %782 = vmatprep.subr.mxu0 0.0
    %783 = vmatpush2.msra.mxu0 0.0
    %784 = vmatprep.subr.mxu0 0.0
    %785 = vmatpush2.msra.mxu0 0.0
    %786 = vmatprep.subr.mxu0 0.0
    %787 = vmatpush2.msra.mxu0 0.0
    %788 = vmatprep.subr.mxu0 0.0
    %789 = vmatpush2.msra.mxu0 0.0
    %790 = vmatprep.subr.mxu0 0.0
    %791 = vmatpush2.msra.mxu0 0.0
    %792 = vmatprep.subr.mxu0 0.0
    %793 = vmatpush2.msra.mxu0 0.0
    %794 = vmatprep.subr.mxu0 0.0
    %795 = vmatpush2.msra.mxu0 0.0
    %796 = vmatprep.subr.mxu0 0.0
    %797 = vmatpush2.msra.mxu0 0.0
    %798 = vmatprep.subr.mxu0 0.0
    %799 = vmatpush2.msra.mxu0 0.0
    %800 = vmatprep.subr.mxu0 0.0
    %801 = vmatpush2.msra.mxu0 0.0
    %802 = vmatprep.mubr.f32.mxu0 0.0
    %803 = vmatmul.mubr.f32.gmra.mxu0 %v736
    %v804 = vpop.f32.mrf.mxu0
    %v805 = vadd.f32 0.0, %v804
    %v806 = vpop.f32.mrf.mxu0
    %v807 = vadd.f32 0.0, %v806
    %808 = vdwg.mxu0
    %809 = vmatprep.subr.mxu0 0.0
    %810 = vmatpush1.msra.mxu0 0.0
    %811 = vmatprep.subr.mxu0 0.0
    %812 = vmatpush1.msra.mxu0 0.0
    %813 = vmatprep.subr.mxu0 0.0
    %814 = vmatpush1.msra.mxu0 0.0
    %815 = vmatprep.subr.mxu0 0.0
    %816 = vmatpush1.msra.mxu0 0.0
    %817 = vmatprep.subr.mxu0 0.0
    %818 = vmatpush1.msra.mxu0 0.0
    %819 = vmatprep.subr.mxu0 0.0
    %820 = vmatpush1.msra.mxu0 0.0
    %821 = vmatprep.subr.mxu0 0.0
    %822 = vmatpush1.msra.mxu0 0.0
    %823 = vmatprep.subr.mxu0 0.0
    %824 = vmatpush1.msra.mxu0 0.0
    %825 = vmatprep.subr.mxu0 0.0
    %826 = vmatpush1.msra.mxu0 0.0
    %827 = vmatprep.subr.mxu0 0.0
    %828 = vmatpush1.msra.mxu0 0.0
    %829 = vmatprep.subr.mxu0 0.0
    %830 = vmatpush1.msra.mxu0 0.0
    %831 = vmatprep.subr.mxu0 %v529
    %832 = vmatpush1.msra.mxu0 %v527
    %833 = vmatprep.subr.mxu0 %v523
    %834 = vmatpush1.msra.mxu0 %v521
    %835 = vmatprep.subr.mxu0 %v517
    %836 = vmatpush1.msra.mxu0 %v515
    %837 = vmatprep.subr.mxu0 %v511
    %838 = vmatpush1.msra.mxu0 %v509
    %839 = vmatprep.subr.mxu0 %v505
    %840 = vmatpush1.msra.mxu0 %v503
    %841 = vmatprep.subr.mxu0 0.0
    %842 = vmatpush2.msra.mxu0 0.0
    %843 = vmatprep.subr.mxu0 0.0
    %844 = vmatpush2.msra.mxu0 0.0
    %845 = vmatprep.subr.mxu0 0.0
    %846 = vmatpush2.msra.mxu0 0.0
    %847 = vmatprep.subr.mxu0 0.0
    %848 = vmatpush2.msra.mxu0 0.0
    %849 = vmatprep.subr.mxu0 0.0
    %850 = vmatpush2.msra.mxu0 0.0
    %851 = vmatprep.subr.mxu0 0.0
    %852 = vmatpush2.msra.mxu0 0.0
    %853 = vmatprep.subr.mxu0 0.0
    %854 = vmatpush2.msra.mxu0 0.0
    %855 = vmatprep.subr.mxu0 0.0
    %856 = vmatpush2.msra.mxu0 0.0
    %857 = vmatprep.subr.mxu0 0.0
    %858 = vmatpush2.msra.mxu0 0.0
    %859 = vmatprep.subr.mxu0 0.0
    %860 = vmatpush2.msra.mxu0 0.0
    %861 = vmatprep.subr.mxu0 0.0
    %862 = vmatpush2.msra.mxu0 0.0
    %863 = vmatprep.subr.mxu0 0.0
    %864 = vmatpush2.msra.mxu0 0.0
    %865 = vmatprep.subr.mxu0 0.0
    %866 = vmatpush2.msra.mxu0 0.0
    %867 = vmatprep.subr.mxu0 0.0
    %868 = vmatpush2.msra.mxu0 0.0
    %869 = vmatprep.subr.mxu0 0.0
    %870 = vmatpush2.msra.mxu0 0.0
    %871 = vmatprep.subr.mxu0 0.0
    %872 = vmatpush2.msra.mxu0 0.0
    %873 = vmatprep.mubr.f32.mxu0 0.0
    %874 = vmatmul.mubr.f32.gmra.mxu0 %v736
    %v875 = vpop.f32.mrf.mxu0
    %v876 = vadd.f32 0.0, %v875
    %v877 = vpop.f32.mrf.mxu0
    %v878 = vadd.f32 0.0, %v877
    %879 = vdwg.mxu0
    %v884 = vcombine.low %v805, %v807
    %v885 = vcombine.low %v876, %v878
    %888 = vst [vmem:[#allocation3 + $0x4] sm:$0xff] %v884
    %889 = vst [vmem:[#allocation3 + $0xc] sm:$0xff] %v885
    %v890 = vld [vmem:[#allocation3] sm:$0xff]
    %v891 = vld [vmem:[#allocation3 + $0x8] sm:$0xff]
    %v892 = vld [vmem:[#allocation3 + $0x10] sm:$0xf]
    %s893 = scalar_lea.vmem [#allocation13], 1
    %v894 = vld [vmem:[%s893] ss:$8 sm:$0xf]
    %v896 = vlaneseq
    %v897 = vshrl.u32 %v896, 7
    %v898 = vsub.s32 0, %v897
    %v899 = vrot.slane %v894, %v898
    %v900 = vlaneseq
    %v901 = vshrl.u32 %v900, 7
    %v902 = vsub.s32 1, %v901
    %v903 = vrot.slane %v894, %v902
    %v904 = vlaneseq
    %v905 = vshrl.u32 %v904, 7
    %v906 = vsub.s32 2, %v905
    %v907 = vrot.slane %v894, %v906
    %v908 = vlaneseq
    %v909 = vshrl.u32 %v908, 7
    %v910 = vsub.s32 3, %v909
    %v911 = vrot.slane %v894, %v910
    %v912 = vcombine.low %v899, %v903
    %v913 = vcombine.low %v907, %v911
    %914 = vrot.lane.b32.xlu0 %v912, 112
    %v915 = vpop.permute.xlu0 %914
    %916 = vrot.lane.b32.xlu0 %v913, 112
    %v917 = vpop.permute.xlu0 %916
    %v918 = vrot.slane %v915, 4
    %v919 = vrot.slane %v917, 4
    %vm920 = vcmask 916480
    %v921 = vsel %vm920, %v918, %v915
    %v922 = vsel %vm721, %v918, %v919
    %v923 = vsel %vm920, %v922, %v917
    %v927 = vmul.f32 %v890, %v921
    %v928 = vmul.f32 %v891, %v923
    %v929 = vmul.f32 %v892, %v919
    %933 = vrot.lane.b32.xlu0 %v927, 127
    %v934 = vpop.permute.xlu0 %933
    %935 = vrot.lane.b32.xlu0 %v928, 127
    %v936 = vpop.permute.xlu0 %935
    %937 = vrot.lane.b32.xlu0 %v929, 127
    %v938 = vpop.permute.xlu0 %937
    %v939 = vrot.slane %v934, 4
    %v940 = vrot.slane %v936, 4
    %v941 = vrot.slane %v938, 4
    %v942 = vsel %vm721, %v939, %v940
    %vm943 = vcmask 1039360
    %v944 = vsel %vm943, %v934, %v942
    %v945 = vsel %vm721, %v940, %v941
    %v946 = vsel %vm943, %v936, %v945
    %v950 = vadd.f32 %v730, %v944
    %v951 = vadd.f32 %v731, %v946
    %v952 = vadd.f32 %v732, %v938
    %s953 = scalar_lea.vmem [#allocation10], 8
    %v954 = vld [vmem:[%s953] sm:$0xf]
    %v956 = vsel %vm534, %v954, 0
    %958 = vmatprep.subr.mxu0 0.0
    %959 = vmatpush1.msra.mxu0 0.0
    %960 = vmatprep.subr.mxu0 0.0
    %961 = vmatpush1.msra.mxu0 0.0
    %962 = vmatprep.subr.mxu0 0.0
    %963 = vmatpush1.msra.mxu0 0.0
    %964 = vmatprep.subr.mxu0 0.0
    %965 = vmatpush1.msra.mxu0 0.0
    %966 = vmatprep.subr.mxu0 0.0
    %967 = vmatpush1.msra.mxu0 0.0
    %968 = vmatprep.subr.mxu0 0.0
    %969 = vmatpush1.msra.mxu0 0.0
    %970 = vmatprep.subr.mxu0 0.0
    %971 = vmatpush1.msra.mxu0 0.0
    %972 = vmatprep.subr.mxu0 0.0
    %973 = vmatpush1.msra.mxu0 0.0
    %974 = vmatprep.subr.mxu0 0.0
    %975 = vmatpush1.msra.mxu0 0.0
    %976 = vmatprep.subr.mxu0 0.0
    %977 = vmatpush1.msra.mxu0 0.0
    %978 = vmatprep.subr.mxu0 0.0
    %979 = vmatpush1.msra.mxu0 0.0
    %980 = vmatprep.subr.mxu0 %v434
    %981 = vmatpush1.msra.mxu0 %v432
    %982 = vmatprep.subr.mxu0 %v428
    %983 = vmatpush1.msra.mxu0 %v426
    %984 = vmatprep.subr.mxu0 %v422
    %985 = vmatpush1.msra.mxu0 %v420
    %986 = vmatprep.subr.mxu0 %v416
    %987 = vmatpush1.msra.mxu0 %v414
    %988 = vmatprep.subr.mxu0 %v410
    %989 = vmatpush1.msra.mxu0 %v408
    %990 = vmatprep.subr.mxu0 0.0
    %991 = vmatpush2.msra.mxu0 0.0
    %992 = vmatprep.subr.mxu0 0.0
    %993 = vmatpush2.msra.mxu0 0.0
    %994 = vmatprep.subr.mxu0 0.0
    %995 = vmatpush2.msra.mxu0 0.0
    %996 = vmatprep.subr.mxu0 0.0
    %997 = vmatpush2.msra.mxu0 0.0
    %998 = vmatprep.subr.mxu0 0.0
    %999 = vmatpush2.msra.mxu0 0.0
    %1000 = vmatprep.subr.mxu0 0.0
    %1001 = vmatpush2.msra.mxu0 0.0
    %1002 = vmatprep.subr.mxu0 0.0
    %1003 = vmatpush2.msra.mxu0 0.0
    %1004 = vmatprep.subr.mxu0 0.0
    %1005 = vmatpush2.msra.mxu0 0.0
    %1006 = vmatprep.subr.mxu0 0.0
    %1007 = vmatpush2.msra.mxu0 0.0
    %1008 = vmatprep.subr.mxu0 0.0
    %1009 = vmatpush2.msra.mxu0 0.0
    %1010 = vmatprep.subr.mxu0 0.0
    %1011 = vmatpush2.msra.mxu0 0.0
    %1012 = vmatprep.subr.mxu0 0.0
    %1013 = vmatpush2.msra.mxu0 0.0
    %1014 = vmatprep.subr.mxu0 0.0
    %1015 = vmatpush2.msra.mxu0 0.0
    %1016 = vmatprep.subr.mxu0 0.0
    %1017 = vmatpush2.msra.mxu0 0.0
    %1018 = vmatprep.subr.mxu0 0.0
    %1019 = vmatpush2.msra.mxu0 0.0
    %1020 = vmatprep.subr.mxu0 0.0
    %1021 = vmatpush2.msra.mxu0 0.0
    %1022 = vmatprep.mubr.f32.mxu0 0.0
    %1023 = vmatmul.mubr.f32.gmra.mxu0 %v956
    %v1024 = vpop.f32.mrf.mxu0
    %v1025 = vadd.f32 0.0, %v1024
    %v1026 = vpop.f32.mrf.mxu0
    %v1027 = vadd.f32 0.0, %v1026
    %1028 = vdwg.mxu0
    %1029 = vmatprep.subr.mxu0 0.0
    %1030 = vmatpush1.msra.mxu0 0.0
    %1031 = vmatprep.subr.mxu0 0.0
    %1032 = vmatpush1.msra.mxu0 0.0
    %1033 = vmatprep.subr.mxu0 0.0
    %1034 = vmatpush1.msra.mxu0 0.0
    %1035 = vmatprep.subr.mxu0 0.0
    %1036 = vmatpush1.msra.mxu0 0.0
    %1037 = vmatprep.subr.mxu0 0.0
    %1038 = vmatpush1.msra.mxu0 0.0
    %1039 = vmatprep.subr.mxu0 0.0
    %1040 = vmatpush1.msra.mxu0 0.0
    %1041 = vmatprep.subr.mxu0 0.0
    %1042 = vmatpush1.msra.mxu0 0.0
    %1043 = vmatprep.subr.mxu0 0.0
    %1044 = vmatpush1.msra.mxu0 0.0
    %1045 = vmatprep.subr.mxu0 0.0
    %1046 = vmatpush1.msra.mxu0 0.0
    %1047 = vmatprep.subr.mxu0 0.0
    %1048 = vmatpush1.msra.mxu0 0.0
    %1049 = vmatprep.subr.mxu0 0.0
    %1050 = vmatpush1.msra.mxu0 0.0
    %1051 = vmatprep.subr.mxu0 %v529
    %1052 = vmatpush1.msra.mxu0 %v527
    %1053 = vmatprep.subr.mxu0 %v523
    %1054 = vmatpush1.msra.mxu0 %v521
    %1055 = vmatprep.subr.mxu0 %v517
    %1056 = vmatpush1.msra.mxu0 %v515
    %1057 = vmatprep.subr.mxu0 %v511
    %1058 = vmatpush1.msra.mxu0 %v509
    %1059 = vmatprep.subr.mxu0 %v505
    %1060 = vmatpush1.msra.mxu0 %v503
    %1061 = vmatprep.subr.mxu0 0.0
    %1062 = vmatpush2.msra.mxu0 0.0
    %1063 = vmatprep.subr.mxu0 0.0
    %1064 = vmatpush2.msra.mxu0 0.0
    %1065 = vmatprep.subr.mxu0 0.0
    %1066 = vmatpush2.msra.mxu0 0.0
    %1067 = vmatprep.subr.mxu0 0.0
    %1068 = vmatpush2.msra.mxu0 0.0
    %1069 = vmatprep.subr.mxu0 0.0
    %1070 = vmatpush2.msra.mxu0 0.0
    %1071 = vmatprep.subr.mxu0 0.0
    %1072 = vmatpush2.msra.mxu0 0.0
    %1073 = vmatprep.subr.mxu0 0.0
    %1074 = vmatpush2.msra.mxu0 0.0
    %1075 = vmatprep.subr.mxu0 0.0
    %1076 = vmatpush2.msra.mxu0 0.0
    %1077 = vmatprep.subr.mxu0 0.0
    %1078 = vmatpush2.msra.mxu0 0.0
    %1079 = vmatprep.subr.mxu0 0.0
    %1080 = vmatpush2.msra.mxu0 0.0
    %1081 = vmatprep.subr.mxu0 0.0
    %1082 = vmatpush2.msra.mxu0 0.0
    %1083 = vmatprep.subr.mxu0 0.0
    %1084 = vmatpush2.msra.mxu0 0.0
    %1085 = vmatprep.subr.mxu0 0.0
    %1086 = vmatpush2.msra.mxu0 0.0
    %1087 = vmatprep.subr.mxu0 0.0
    %1088 = vmatpush2.msra.mxu0 0.0
    %1089 = vmatprep.subr.mxu0 0.0
    %1090 = vmatpush2.msra.mxu0 0.0
    %1091 = vmatprep.subr.mxu0 0.0
    %1092 = vmatpush2.msra.mxu0 0.0
    %1093 = vmatprep.mubr.f32.mxu0 0.0
    %1094 = vmatmul.mubr.f32.gmra.mxu0 %v956
    %v1095 = vpop.f32.mrf.mxu0
    %v1096 = vadd.f32 0.0, %v1095
    %v1097 = vpop.f32.mrf.mxu0
    %v1098 = vadd.f32 0.0, %v1097
    %1099 = vdwg.mxu0
    %v1104 = vcombine.low %v1025, %v1027
    %v1105 = vcombine.low %v1096, %v1098
    %1108 = vst [vmem:[#allocation3 + $0x4] sm:$0xff] %v1104
    %1109 = vst [vmem:[#allocation3 + $0xc] sm:$0xff] %v1105
    %v1110 = vld [vmem:[#allocation3] sm:$0xff]
    %v1111 = vld [vmem:[#allocation3 + $0x8] sm:$0xff]
    %v1112 = vld [vmem:[#allocation3 + $0x10] sm:$0xf]
    %s1113 = scalar_lea.vmem [#allocation13], 2
    %v1114 = vld [vmem:[%s1113] ss:$8 sm:$0xf]
    %v1116 = vlaneseq
    %v1117 = vshrl.u32 %v1116, 7
    %v1118 = vsub.s32 0, %v1117
    %v1119 = vrot.slane %v1114, %v1118
    %v1120 = vlaneseq
    %v1121 = vshrl.u32 %v1120, 7
    %v1122 = vsub.s32 1, %v1121
    %v1123 = vrot.slane %v1114, %v1122
    %v1124 = vlaneseq
    %v1125 = vshrl.u32 %v1124, 7
    %v1126 = vsub.s32 2, %v1125
    %v1127 = vrot.slane %v1114, %v1126
    %v1128 = vlaneseq
    %v1129 = vshrl.u32 %v1128, 7
    %v1130 = vsub.s32 3, %v1129
    %v1131 = vrot.slane %v1114, %v1130
    %v1132 = vcombine.low %v1119, %v1123
    %v1133 = vcombine.low %v1127, %v1131
    %1134 = vrot.lane.b32.xlu0 %v1132, 113
    %v1135 = vpop.permute.xlu0 %1134
    %1136 = vrot.lane.b32.xlu0 %v1133, 113
    %v1137 = vpop.permute.xlu0 %1136
    %v1138 = vrot.slane %v1135, 4
    %v1139 = vrot.slane %v1137, 4
    %vm1140 = vcmask 924672
    %v1141 = vsel %vm1140, %v1138, %v1135
    %v1142 = vsel %vm721, %v1138, %v1139
    %v1143 = vsel %vm1140, %v1142, %v1137
    %v1147 = vmul.f32 %v1110, %v1141
    %v1148 = vmul.f32 %v1111, %v1143
    %v1149 = vmul.f32 %v1112, %v1139
    %1153 = vrot.lane.b32.xlu0 %v1147, 126
    %v1154 = vpop.permute.xlu0 %1153
    %1155 = vrot.lane.b32.xlu0 %v1148, 126
    %v1156 = vpop.permute.xlu0 %1155
    %1157 = vrot.lane.b32.xlu0 %v1149, 126
    %v1158 = vpop.permute.xlu0 %1157
    %v1159 = vrot.slane %v1154, 4
    %v1160 = vrot.slane %v1156, 4
    %v1161 = vrot.slane %v1158, 4
    %v1162 = vsel %vm721, %v1159, %v1160
    %vm1163 = vcmask 1031168
    %v1164 = vsel %vm1163, %v1154, %v1162
    %v1165 = vsel %vm721, %v1160, %v1161
    %v1166 = vsel %vm1163, %v1156, %v1165
    %v1170 = vadd.f32 %v950, %v1164
    %v1171 = vadd.f32 %v951, %v1166
    %v1172 = vadd.f32 %v952, %v1158
    %s1173 = scalar_lea.vmem [#allocation10], 12
    %v1174 = vld [vmem:[%s1173] sm:$0xf]
    %v1176 = vsel %vm534, %v1174, 0
    %1178 = vmatprep.subr.mxu0 0.0
    %1179 = vmatpush1.msra.mxu0 0.0
    %1180 = vmatprep.subr.mxu0 0.0
    %1181 = vmatpush1.msra.mxu0 0.0
    %1182 = vmatprep.subr.mxu0 0.0
    %1183 = vmatpush1.msra.mxu0 0.0
    %1184 = vmatprep.subr.mxu0 0.0
    %1185 = vmatpush1.msra.mxu0 0.0
    %1186 = vmatprep.subr.mxu0 0.0
    %1187 = vmatpush1.msra.mxu0 0.0
    %1188 = vmatprep.subr.mxu0 0.0
    %1189 = vmatpush1.msra.mxu0 0.0
    %1190 = vmatprep.subr.mxu0 0.0
    %1191 = vmatpush1.msra.mxu0 0.0
    %1192 = vmatprep.subr.mxu0 0.0
    %1193 = vmatpush1.msra.mxu0 0.0
    %1194 = vmatprep.subr.mxu0 0.0
    %1195 = vmatpush1.msra.mxu0 0.0
    %1196 = vmatprep.subr.mxu0 0.0
    %1197 = vmatpush1.msra.mxu0 0.0
    %1198 = vmatprep.subr.mxu0 0.0
    %1199 = vmatpush1.msra.mxu0 0.0
    %1200 = vmatprep.subr.mxu0 %v434
    %1201 = vmatpush1.msra.mxu0 %v432
    %1202 = vmatprep.subr.mxu0 %v428
    %1203 = vmatpush1.msra.mxu0 %v426
    %1204 = vmatprep.subr.mxu0 %v422
    %1205 = vmatpush1.msra.mxu0 %v420
    %1206 = vmatprep.subr.mxu0 %v416
    %1207 = vmatpush1.msra.mxu0 %v414
    %1208 = vmatprep.subr.mxu0 %v410
    %1209 = vmatpush1.msra.mxu0 %v408
    %1210 = vmatprep.subr.mxu0 0.0
    %1211 = vmatpush2.msra.mxu0 0.0
    %1212 = vmatprep.subr.mxu0 0.0
    %1213 = vmatpush2.msra.mxu0 0.0
    %1214 = vmatprep.subr.mxu0 0.0
    %1215 = vmatpush2.msra.mxu0 0.0
    %1216 = vmatprep.subr.mxu0 0.0
    %1217 = vmatpush2.msra.mxu0 0.0
    %1218 = vmatprep.subr.mxu0 0.0
    %1219 = vmatpush2.msra.mxu0 0.0
    %1220 = vmatprep.subr.mxu0 0.0
    %1221 = vmatpush2.msra.mxu0 0.0
    %1222 = vmatprep.subr.mxu0 0.0
    %1223 = vmatpush2.msra.mxu0 0.0
    %1224 = vmatprep.subr.mxu0 0.0
    %1225 = vmatpush2.msra.mxu0 0.0
    %1226 = vmatprep.subr.mxu0 0.0
    %1227 = vmatpush2.msra.mxu0 0.0
    %1228 = vmatprep.subr.mxu0 0.0
    %1229 = vmatpush2.msra.mxu0 0.0
    %1230 = vmatprep.subr.mxu0 0.0
    %1231 = vmatpush2.msra.mxu0 0.0
    %1232 = vmatprep.subr.mxu0 0.0
    %1233 = vmatpush2.msra.mxu0 0.0
    %1234 = vmatprep.subr.mxu0 0.0
    %1235 = vmatpush2.msra.mxu0 0.0
    %1236 = vmatprep.subr.mxu0 0.0
    %1237 = vmatpush2.msra.mxu0 0.0
    %1238 = vmatprep.subr.mxu0 0.0
    %1239 = vmatpush2.msra.mxu0 0.0
    %1240 = vmatprep.subr.mxu0 0.0
    %1241 = vmatpush2.msra.mxu0 0.0
    %1242 = vmatprep.mubr.f32.mxu0 0.0
    %1243 = vmatmul.mubr.f32.gmra.mxu0 %v1176
    %v1244 = vpop.f32.mrf.mxu0
    %v1245 = vadd.f32 0.0, %v1244
    %v1246 = vpop.f32.mrf.mxu0
    %v1247 = vadd.f32 0.0, %v1246
    %1248 = vdwg.mxu0
    %1249 = vmatprep.subr.mxu0 0.0
    %1250 = vmatpush1.msra.mxu0 0.0
    %1251 = vmatprep.subr.mxu0 0.0
    %1252 = vmatpush1.msra.mxu0 0.0
    %1253 = vmatprep.subr.mxu0 0.0
    %1254 = vmatpush1.msra.mxu0 0.0
    %1255 = vmatprep.subr.mxu0 0.0
    %1256 = vmatpush1.msra.mxu0 0.0
    %1257 = vmatprep.subr.mxu0 0.0
    %1258 = vmatpush1.msra.mxu0 0.0
    %1259 = vmatprep.subr.mxu0 0.0
    %1260 = vmatpush1.msra.mxu0 0.0
    %1261 = vmatprep.subr.mxu0 0.0
    %1262 = vmatpush1.msra.mxu0 0.0
    %1263 = vmatprep.subr.mxu0 0.0
    %1264 = vmatpush1.msra.mxu0 0.0
    %1265 = vmatprep.subr.mxu0 0.0
    %1266 = vmatpush1.msra.mxu0 0.0
    %1267 = vmatprep.subr.mxu0 0.0
    %1268 = vmatpush1.msra.mxu0 0.0
    %1269 = vmatprep.subr.mxu0 0.0
    %1270 = vmatpush1.msra.mxu0 0.0
    %1271 = vmatprep.subr.mxu0 %v529
    %1272 = vmatpush1.msra.mxu0 %v527
    %1273 = vmatprep.subr.mxu0 %v523
    %1274 = vmatpush1.msra.mxu0 %v521
    %1275 = vmatprep.subr.mxu0 %v517
    %1276 = vmatpush1.msra.mxu0 %v515
    %1277 = vmatprep.subr.mxu0 %v511
    %1278 = vmatpush1.msra.mxu0 %v509
    %1279 = vmatprep.subr.mxu0 %v505
    %1280 = vmatpush1.msra.mxu0 %v503
    %1281 = vmatprep.subr.mxu0 0.0
    %1282 = vmatpush2.msra.mxu0 0.0
    %1283 = vmatprep.subr.mxu0 0.0
    %1284 = vmatpush2.msra.mxu0 0.0
    %1285 = vmatprep.subr.mxu0 0.0
    %1286 = vmatpush2.msra.mxu0 0.0
    %1287 = vmatprep.subr.mxu0 0.0
    %1288 = vmatpush2.msra.mxu0 0.0
    %1289 = vmatprep.subr.mxu0 0.0
    %1290 = vmatpush2.msra.mxu0 0.0
    %1291 = vmatprep.subr.mxu0 0.0
    %1292 = vmatpush2.msra.mxu0 0.0
    %1293 = vmatprep.subr.mxu0 0.0
    %1294 = vmatpush2.msra.mxu0 0.0
    %1295 = vmatprep.subr.mxu0 0.0
    %1296 = vmatpush2.msra.mxu0 0.0
    %1297 = vmatprep.subr.mxu0 0.0
    %1298 = vmatpush2.msra.mxu0 0.0
    %1299 = vmatprep.subr.mxu0 0.0
    %1300 = vmatpush2.msra.mxu0 0.0
    %1301 = vmatprep.subr.mxu0 0.0
    %1302 = vmatpush2.msra.mxu0 0.0
    %1303 = vmatprep.subr.mxu0 0.0
    %1304 = vmatpush2.msra.mxu0 0.0
    %1305 = vmatprep.subr.mxu0 0.0
    %1306 = vmatpush2.msra.mxu0 0.0
    %1307 = vmatprep.subr.mxu0 0.0
    %1308 = vmatpush2.msra.mxu0 0.0
    %1309 = vmatprep.subr.mxu0 0.0
    %1310 = vmatpush2.msra.mxu0 0.0
    %1311 = vmatprep.subr.mxu0 0.0
    %1312 = vmatpush2.msra.mxu0 0.0
    %1313 = vmatprep.mubr.f32.mxu0 0.0
    %1314 = vmatmul.mubr.f32.gmra.mxu0 %v1176
    %v1315 = vpop.f32.mrf.mxu0
    %v1316 = vadd.f32 0.0, %v1315
    %v1317 = vpop.f32.mrf.mxu0
    %v1318 = vadd.f32 0.0, %v1317
    %1319 = vdwg.mxu0
    %v1324 = vcombine.low %v1245, %v1247
    %v1325 = vcombine.low %v1316, %v1318
    %1328 = vst [vmem:[#allocation3 + $0x4] sm:$0xff] %v1324
    %1329 = vst [vmem:[#allocation3 + $0xc] sm:$0xff] %v1325
    %v1330 = vld [vmem:[#allocation3] sm:$0xff]
    %v1331 = vld [vmem:[#allocation3 + $0x8] sm:$0xff]
    %v1332 = vld [vmem:[#allocation3 + $0x10] sm:$0xf]
    %s1333 = scalar_lea.vmem [#allocation13], 3
    %v1334 = vld [vmem:[%s1333] ss:$8 sm:$0xf]
    %v1336 = vlaneseq
    %v1337 = vshrl.u32 %v1336, 7
    %v1338 = vsub.s32 0, %v1337
    %v1339 = vrot.slane %v1334, %v1338
    %v1340 = vlaneseq
    %v1341 = vshrl.u32 %v1340, 7
    %v1342 = vsub.s32 1, %v1341
    %v1343 = vrot.slane %v1334, %v1342
    %v1344 = vlaneseq
    %v1345 = vshrl.u32 %v1344, 7
    %v1346 = vsub.s32 2, %v1345
    %v1347 = vrot.slane %v1334, %v1346
    %v1348 = vlaneseq
    %v1349 = vshrl.u32 %v1348, 7
    %v1350 = vsub.s32 3, %v1349
    %v1351 = vrot.slane %v1334, %v1350
    %v1352 = vcombine.low %v1339, %v1343
    %v1353 = vcombine.low %v1347, %v1351
    %1354 = vrot.lane.b32.xlu0 %v1352, 127
    %v1355 = vpop.permute.xlu0 %1354
    %1356 = vrot.lane.b32.xlu0 %v1353, 127
    %v1357 = vpop.permute.xlu0 %1356
    %v1358 = vrot.slane %v1355, 4
    %v1359 = vrot.slane %v1357, 4
    %v1360 = vsel %vm943, %v1358, %v1355
    %v1361 = vsel %vm721, %v1358, %v1359
    %v1362 = vsel %vm943, %v1361, %v1357
    %v1366 = vmul.f32 %v1330, %v1360
    %v1367 = vmul.f32 %v1331, %v1362
    %v1368 = vmul.f32 %v1332, %v1359
    %1372 = vrot.lane.b32.xlu0 %v1366, 112
    %v1373 = vpop.permute.xlu0 %1372
    %1374 = vrot.lane.b32.xlu0 %v1367, 112
    %v1375 = vpop.permute.xlu0 %1374
    %1376 = vrot.lane.b32.xlu0 %v1368, 112
    %v1377 = vpop.permute.xlu0 %1376
    %v1378 = vrot.slane %v1373, 4
    %v1379 = vrot.slane %v1375, 4
    %v1380 = vrot.slane %v1377, 4
    %v1381 = vsel %vm721, %v1378, %v1379
    %v1382 = vsel %vm920, %v1373, %v1381
    %v1383 = vsel %vm721, %v1379, %v1380
    %v1384 = vsel %vm920, %v1375, %v1383
    %v1388 = vadd.f32 %v1170, %v1382
    %v1389 = vadd.f32 %v1171, %v1384
    %v1390 = vadd.f32 %v1172, %v1377
    %s1391 = scalar_lea.vmem [#allocation10], 16
    %v1392 = vld [vmem:[%s1391] sm:$0xf]
    %v1394 = vsel %vm534, %v1392, 0
    %1396 = vmatprep.subr.mxu0 0.0
    %1397 = vmatpush1.msra.mxu0 0.0
    %1398 = vmatprep.subr.mxu0 0.0
    %1399 = vmatpush1.msra.mxu0 0.0
    %1400 = vmatprep.subr.mxu0 0.0
    %1401 = vmatpush1.msra.mxu0 0.0
    %1402 = vmatprep.subr.mxu0 0.0
    %1403 = vmatpush1.msra.mxu0 0.0
    %1404 = vmatprep.subr.mxu0 0.0
    %1405 = vmatpush1.msra.mxu0 0.0
    %1406 = vmatprep.subr.mxu0 0.0
    %1407 = vmatpush1.msra.mxu0 0.0
    %1408 = vmatprep.subr.mxu0 0.0
    %1409 = vmatpush1.msra.mxu0 0.0
    %1410 = vmatprep.subr.mxu0 0.0
    %1411 = vmatpush1.msra.mxu0 0.0
    %1412 = vmatprep.subr.mxu0 0.0
    %1413 = vmatpush1.msra.mxu0 0.0
    %1414 = vmatprep.subr.mxu0 0.0
    %1415 = vmatpush1.msra.mxu0 0.0
    %1416 = vmatprep.subr.mxu0 0.0
    %1417 = vmatpush1.msra.mxu0 0.0
    %1418 = vmatprep.subr.mxu0 %v434
    %1419 = vmatpush1.msra.mxu0 %v432
    %1420 = vmatprep.subr.mxu0 %v428
    %1421 = vmatpush1.msra.mxu0 %v426
    %1422 = vmatprep.subr.mxu0 %v422
    %1423 = vmatpush1.msra.mxu0 %v420
    %1424 = vmatprep.subr.mxu0 %v416
    %1425 = vmatpush1.msra.mxu0 %v414
    %1426 = vmatprep.subr.mxu0 %v410
    %1427 = vmatpush1.msra.mxu0 %v408
    %1428 = vmatprep.subr.mxu0 0.0
    %1429 = vmatpush2.msra.mxu0 0.0
    %1430 = vmatprep.subr.mxu0 0.0
    %1431 = vmatpush2.msra.mxu0 0.0
    %1432 = vmatprep.subr.mxu0 0.0
    %1433 = vmatpush2.msra.mxu0 0.0
    %1434 = vmatprep.subr.mxu0 0.0
    %1435 = vmatpush2.msra.mxu0 0.0
    %1436 = vmatprep.subr.mxu0 0.0
    %1437 = vmatpush2.msra.mxu0 0.0
    %1438 = vmatprep.subr.mxu0 0.0
    %1439 = vmatpush2.msra.mxu0 0.0
    %1440 = vmatprep.subr.mxu0 0.0
    %1441 = vmatpush2.msra.mxu0 0.0
    %1442 = vmatprep.subr.mxu0 0.0
    %1443 = vmatpush2.msra.mxu0 0.0
    %1444 = vmatprep.subr.mxu0 0.0
    %1445 = vmatpush2.msra.mxu0 0.0
    %1446 = vmatprep.subr.mxu0 0.0
    %1447 = vmatpush2.msra.mxu0 0.0
    %1448 = vmatprep.subr.mxu0 0.0
    %1449 = vmatpush2.msra.mxu0 0.0
    %1450 = vmatprep.subr.mxu0 0.0
    %1451 = vmatpush2.msra.mxu0 0.0
    %1452 = vmatprep.subr.mxu0 0.0
    %1453 = vmatpush2.msra.mxu0 0.0
    %1454 = vmatprep.subr.mxu0 0.0
    %1455 = vmatpush2.msra.mxu0 0.0
    %1456 = vmatprep.subr.mxu0 0.0
    %1457 = vmatpush2.msra.mxu0 0.0
    %1458 = vmatprep.subr.mxu0 0.0
    %1459 = vmatpush2.msra.mxu0 0.0
    %1460 = vmatprep.mubr.f32.mxu0 0.0
    %1461 = vmatmul.mubr.f32.gmra.mxu0 %v1394
    %v1462 = vpop.f32.mrf.mxu0
    %v1463 = vadd.f32 0.0, %v1462
    %v1464 = vpop.f32.mrf.mxu0
    %v1465 = vadd.f32 0.0, %v1464
    %1466 = vdwg.mxu0
    %1467 = vmatprep.subr.mxu0 0.0
    %1468 = vmatpush1.msra.mxu0 0.0
    %1469 = vmatprep.subr.mxu0 0.0
    %1470 = vmatpush1.msra.mxu0 0.0
    %1471 = vmatprep.subr.mxu0 0.0
    %1472 = vmatpush1.msra.mxu0 0.0
    %1473 = vmatprep.subr.mxu0 0.0
    %1474 = vmatpush1.msra.mxu0 0.0
    %1475 = vmatprep.subr.mxu0 0.0
    %1476 = vmatpush1.msra.mxu0 0.0
    %1477 = vmatprep.subr.mxu0 0.0
    %1478 = vmatpush1.msra.mxu0 0.0
    %1479 = vmatprep.subr.mxu0 0.0
    %1480 = vmatpush1.msra.mxu0 0.0
    %1481 = vmatprep.subr.mxu0 0.0
    %1482 = vmatpush1.msra.mxu0 0.0
    %1483 = vmatprep.subr.mxu0 0.0
    %1484 = vmatpush1.msra.mxu0 0.0
    %1485 = vmatprep.subr.mxu0 0.0
    %1486 = vmatpush1.msra.mxu0 0.0
    %1487 = vmatprep.subr.mxu0 0.0
    %1488 = vmatpush1.msra.mxu0 0.0
    %1489 = vmatprep.subr.mxu0 %v529
    %1490 = vmatpush1.msra.mxu0 %v527
    %1491 = vmatprep.subr.mxu0 %v523
    %1492 = vmatpush1.msra.mxu0 %v521
    %1493 = vmatprep.subr.mxu0 %v517
    %1494 = vmatpush1.msra.mxu0 %v515
    %1495 = vmatprep.subr.mxu0 %v511
    %1496 = vmatpush1.msra.mxu0 %v509
    %1497 = vmatprep.subr.mxu0 %v505
    %1498 = vmatpush1.msra.mxu0 %v503
    %1499 = vmatprep.subr.mxu0 0.0
    %1500 = vmatpush2.msra.mxu0 0.0
    %1501 = vmatprep.subr.mxu0 0.0
    %1502 = vmatpush2.msra.mxu0 0.0
    %1503 = vmatprep.subr.mxu0 0.0
    %1504 = vmatpush2.msra.mxu0 0.0
    %1505 = vmatprep.subr.mxu0 0.0
    %1506 = vmatpush2.msra.mxu0 0.0
    %1507 = vmatprep.subr.mxu0 0.0
    %1508 = vmatpush2.msra.mxu0 0.0
    %1509 = vmatprep.subr.mxu0 0.0
    %1510 = vmatpush2.msra.mxu0 0.0
    %1511 = vmatprep.subr.mxu0 0.0
    %1512 = vmatpush2.msra.mxu0 0.0
    %1513 = vmatprep.subr.mxu0 0.0
    %1514 = vmatpush2.msra.mxu0 0.0
    %1515 = vmatprep.subr.mxu0 0.0
    %1516 = vmatpush2.msra.mxu0 0.0
    %1517 = vmatprep.subr.mxu0 0.0
    %1518 = vmatpush2.msra.mxu0 0.0
    %1519 = vmatprep.subr.mxu0 0.0
    %1520 = vmatpush2.msra.mxu0 0.0
    %1521 = vmatprep.subr.mxu0 0.0
    %1522 = vmatpush2.msra.mxu0 0.0
    %1523 = vmatprep.subr.mxu0 0.0
    %1524 = vmatpush2.msra.mxu0 0.0
    %1525 = vmatprep.subr.mxu0 0.0
    %1526 = vmatpush2.msra.mxu0 0.0
    %1527 = vmatprep.subr.mxu0 0.0
    %1528 = vmatpush2.msra.mxu0 0.0
    %1529 = vmatprep.subr.mxu0 0.0
    %1530 = vmatpush2.msra.mxu0 0.0
    %1531 = vmatprep.mubr.f32.mxu0 0.0
    %1532 = vmatmul.mubr.f32.gmra.mxu0 %v1394
    %v1533 = vpop.f32.mrf.mxu0
    %v1534 = vadd.f32 0.0, %v1533
    %v1535 = vpop.f32.mrf.mxu0
    %v1536 = vadd.f32 0.0, %v1535
    %1537 = vdwg.mxu0
    %v1542 = vcombine.low %v1463, %v1465
    %v1543 = vcombine.low %v1534, %v1536
    %1544 = vrot.lane.b32.xlu0 %v1542, 111
    %v1545 = vpop.permute.xlu0 %1544
    %1546 = vrot.lane.b32.xlu0 %v1543, 111
    %v1547 = vpop.permute.xlu0 %1546
    %v1548 = vrot.slane %v1545, 4
    %v1549 = vrot.slane %v1547, 4
    %v1550 = vsel %vm719, %v1548, %v1545
    %v1551 = vsel %vm721, %v1548, %v1549
    %v1552 = vsel %vm719, %v1551, %v1547
    %v1556 = vadd.f32 %v1388, %v1550
    %v1557 = vadd.f32 %v1389, %v1552
    %v1558 = vadd.f32 %v1390, %v1549
    %s1559 = scalar_lea.vmem [#allocation10], 20
    %v1560 = vld [vmem:[%s1559] sm:$0xf]
    %v1562 = vsel %vm534, %v1560, 0
    %1564 = vmatprep.subr.mxu0 0.0
    %1565 = vmatpush1.msra.mxu0 0.0
    %1566 = vmatprep.subr.mxu0 0.0
    %1567 = vmatpush1.msra.mxu0 0.0
    %1568 = vmatprep.subr.mxu0 0.0
    %1569 = vmatpush1.msra.mxu0 0.0
    %1570 = vmatprep.subr.mxu0 0.0
    %1571 = vmatpush1.msra.mxu0 0.0
    %1572 = vmatprep.subr.mxu0 0.0
    %1573 = vmatpush1.msra.mxu0 0.0
    %1574 = vmatprep.subr.mxu0 0.0
    %1575 = vmatpush1.msra.mxu0 0.0
    %1576 = vmatprep.subr.mxu0 0.0
    %1577 = vmatpush1.msra.mxu0 0.0
    %1578 = vmatprep.subr.mxu0 0.0
    %1579 = vmatpush1.msra.mxu0 0.0
    %1580 = vmatprep.subr.mxu0 0.0
    %1581 = vmatpush1.msra.mxu0 0.0
    %1582 = vmatprep.subr.mxu0 0.0
    %1583 = vmatpush1.msra.mxu0 0.0
    %1584 = vmatprep.subr.mxu0 0.0
    %1585 = vmatpush1.msra.mxu0 0.0
    %1586 = vmatprep.subr.mxu0 %v434
    %1587 = vmatpush1.msra.mxu0 %v432
    %1588 = vmatprep.subr.mxu0 %v428
    %1589 = vmatpush1.msra.mxu0 %v426
    %1590 = vmatprep.subr.mxu0 %v422
    %1591 = vmatpush1.msra.mxu0 %v420
    %1592 = vmatprep.subr.mxu0 %v416
    %1593 = vmatpush1.msra.mxu0 %v414
    %1594 = vmatprep.subr.mxu0 %v410
    %1595 = vmatpush1.msra.mxu0 %v408
    %1596 = vmatprep.subr.mxu0 0.0
    %1597 = vmatpush2.msra.mxu0 0.0
    %1598 = vmatprep.subr.mxu0 0.0
    %1599 = vmatpush2.msra.mxu0 0.0
    %1600 = vmatprep.subr.mxu0 0.0
    %1601 = vmatpush2.msra.mxu0 0.0
    %1602 = vmatprep.subr.mxu0 0.0
    %1603 = vmatpush2.msra.mxu0 0.0
    %1604 = vmatprep.subr.mxu0 0.0
    %1605 = vmatpush2.msra.mxu0 0.0
    %1606 = vmatprep.subr.mxu0 0.0
    %1607 = vmatpush2.msra.mxu0 0.0
    %1608 = vmatprep.subr.mxu0 0.0
    %1609 = vmatpush2.msra.mxu0 0.0
    %1610 = vmatprep.subr.mxu0 0.0
    %1611 = vmatpush2.msra.mxu0 0.0
    %1612 = vmatprep.subr.mxu0 0.0
    %1613 = vmatpush2.msra.mxu0 0.0
    %1614 = vmatprep.subr.mxu0 0.0
    %1615 = vmatpush2.msra.mxu0 0.0
    %1616 = vmatprep.subr.mxu0 0.0
    %1617 = vmatpush2.msra.mxu0 0.0
    %1618 = vmatprep.subr.mxu0 0.0
    %1619 = vmatpush2.msra.mxu0 0.0
    %1620 = vmatprep.subr.mxu0 0.0
    %1621 = vmatpush2.msra.mxu0 0.0
    %1622 = vmatprep.subr.mxu0 0.0
    %1623 = vmatpush2.msra.mxu0 0.0
    %1624 = vmatprep.subr.mxu0 0.0
    %1625 = vmatpush2.msra.mxu0 0.0
    %1626 = vmatprep.subr.mxu0 0.0
    %1627 = vmatpush2.msra.mxu0 0.0
    %1628 = vmatprep.mubr.f32.mxu0 0.0
    %1629 = vmatmul.mubr.f32.gmra.mxu0 %v1562
    %v1630 = vpop.f32.mrf.mxu0
    %v1631 = vadd.f32 0.0, %v1630
    %v1632 = vpop.f32.mrf.mxu0
    %v1633 = vadd.f32 0.0, %v1632
    %1634 = vdwg.mxu0
    %1635 = vmatprep.subr.mxu0 0.0
    %1636 = vmatpush1.msra.mxu0 0.0
    %1637 = vmatprep.subr.mxu0 0.0
    %1638 = vmatpush1.msra.mxu0 0.0
    %1639 = vmatprep.subr.mxu0 0.0
    %1640 = vmatpush1.msra.mxu0 0.0
    %1641 = vmatprep.subr.mxu0 0.0
    %1642 = vmatpush1.msra.mxu0 0.0
    %1643 = vmatprep.subr.mxu0 0.0
    %1644 = vmatpush1.msra.mxu0 0.0
    %1645 = vmatprep.subr.mxu0 0.0
    %1646 = vmatpush1.msra.mxu0 0.0
    %1647 = vmatprep.subr.mxu0 0.0
    %1648 = vmatpush1.msra.mxu0 0.0
    %1649 = vmatprep.subr.mxu0 0.0
    %1650 = vmatpush1.msra.mxu0 0.0
    %1651 = vmatprep.subr.mxu0 0.0
    %1652 = vmatpush1.msra.mxu0 0.0
    %1653 = vmatprep.subr.mxu0 0.0
    %1654 = vmatpush1.msra.mxu0 0.0
    %1655 = vmatprep.subr.mxu0 0.0
    %1656 = vmatpush1.msra.mxu0 0.0
    %1657 = vmatprep.subr.mxu0 %v529
    %1658 = vmatpush1.msra.mxu0 %v527
    %1659 = vmatprep.subr.mxu0 %v523
    %1660 = vmatpush1.msra.mxu0 %v521
    %1661 = vmatprep.subr.mxu0 %v517
    %1662 = vmatpush1.msra.mxu0 %v515
    %1663 = vmatprep.subr.mxu0 %v511
    %1664 = vmatpush1.msra.mxu0 %v509
    %1665 = vmatprep.subr.mxu0 %v505
    %1666 = vmatpush1.msra.mxu0 %v503
    %1667 = vmatprep.subr.mxu0 0.0
    %1668 = vmatpush2.msra.mxu0 0.0
    %1669 = vmatprep.subr.mxu0 0.0
    %1670 = vmatpush2.msra.mxu0 0.0
    %1671 = vmatprep.subr.mxu0 0.0
    %1672 = vmatpush2.msra.mxu0 0.0
    %1673 = vmatprep.subr.mxu0 0.0
    %1674 = vmatpush2.msra.mxu0 0.0
    %1675 = vmatprep.subr.mxu0 0.0
    %1676 = vmatpush2.msra.mxu0 0.0
    %1677 = vmatprep.subr.mxu0 0.0
    %1678 = vmatpush2.msra.mxu0 0.0
    %1679 = vmatprep.subr.mxu0 0.0
    %1680 = vmatpush2.msra.mxu0 0.0
    %1681 = vmatprep.subr.mxu0 0.0
    %1682 = vmatpush2.msra.mxu0 0.0
    %1683 = vmatprep.subr.mxu0 0.0
    %1684 = vmatpush2.msra.mxu0 0.0
    %1685 = vmatprep.subr.mxu0 0.0
    %1686 = vmatpush2.msra.mxu0 0.0
    %1687 = vmatprep.subr.mxu0 0.0
    %1688 = vmatpush2.msra.mxu0 0.0
    %1689 = vmatprep.subr.mxu0 0.0
    %1690 = vmatpush2.msra.mxu0 0.0
    %1691 = vmatprep.subr.mxu0 0.0
    %1692 = vmatpush2.msra.mxu0 0.0
    %1693 = vmatprep.subr.mxu0 0.0
    %1694 = vmatpush2.msra.mxu0 0.0
    %1695 = vmatprep.subr.mxu0 0.0
    %1696 = vmatpush2.msra.mxu0 0.0
    %1697 = vmatprep.subr.mxu0 0.0
    %1698 = vmatpush2.msra.mxu0 0.0
    %1699 = vmatprep.mubr.f32.mxu0 0.0
    %1700 = vmatmul.mubr.f32.gmra.mxu0 %v1562
    %v1701 = vpop.f32.mrf.mxu0
    %v1702 = vadd.f32 0.0, %v1701
    %v1703 = vpop.f32.mrf.mxu0
    %v1704 = vadd.f32 0.0, %v1703
    %1705 = vdwg.mxu0
    %v1710 = vcombine.low %v1631, %v1633
    %v1711 = vcombine.low %v1702, %v1704
    %1714 = vst [vmem:[#allocation3 + $0x4] sm:$0xff] %v1710
    %1715 = vst [vmem:[#allocation3 + $0xc] sm:$0xff] %v1711
    %v1716 = vld [vmem:[#allocation3 + $0x4] sm:$0xff]
    %v1717 = vld [vmem:[#allocation3 + $0xc] sm:$0xff]
    %v1718 = vld [vmem:[#allocation3 + $0x14] sm:$0xf]
    %s1719 = scalar_lea.vmem [#allocation13], 5
    %v1720 = vld [vmem:[%s1719] ss:$8 sm:$0xf]
    %v1722 = vlaneseq
    %v1723 = vshrl.u32 %v1722, 7
    %v1724 = vsub.s32 0, %v1723
    %v1725 = vrot.slane %v1720, %v1724
    %v1726 = vlaneseq
    %v1727 = vshrl.u32 %v1726, 7
    %v1728 = vsub.s32 1, %v1727
    %v1729 = vrot.slane %v1720, %v1728
    %v1730 = vlaneseq
    %v1731 = vshrl.u32 %v1730, 7
    %v1732 = vsub.s32 2, %v1731
    %v1733 = vrot.slane %v1720, %v1732
    %v1734 = vlaneseq
    %v1735 = vshrl.u32 %v1734, 7
    %v1736 = vsub.s32 3, %v1735
    %v1737 = vrot.slane %v1720, %v1736
    %v1738 = vcombine.low %v1725, %v1729
    %v1739 = vcombine.low %v1733, %v1737
    %1740 = vrot.lane.b32.xlu0 %v1738, 1
    %v1741 = vpop.permute.xlu0 %1740
    %1742 = vrot.lane.b32.xlu0 %v1739, 1
    %v1743 = vpop.permute.xlu0 %1742
    %v1744 = vrot.slane %v1741, 4
    %v1745 = vrot.slane %v1743, 4
    %vm1746 = vcmask 7168
    %v1747 = vsel %vm1746, %v1744, %v1741
    %v1748 = vsel %vm721, %v1744, %v1745
    %v1749 = vsel %vm1746, %v1748, %v1743
    %v1753 = vmul.f32 %v1716, %v1747
    %v1754 = vmul.f32 %v1717, %v1749
    %v1755 = vmul.f32 %v1718, %v1745
    %1759 = vrot.lane.b32.xlu0 %v1753, 110
    %v1760 = vpop.permute.xlu0 %1759
    %1761 = vrot.lane.b32.xlu0 %v1754, 110
    %v1762 = vpop.permute.xlu0 %1761
    %1763 = vrot.lane.b32.xlu0 %v1755, 110
    %v1764 = vpop.permute.xlu0 %1763
    %v1765 = vrot.slane %v1760, 4
    %v1766 = vrot.slane %v1762, 4
    %vm1767 = vcmask 900096
    %v1768 = vsel %vm1767, %v1765, %v1760
    %v1769 = vsel %vm721, %v1765, %v1766
    %v1770 = vsel %vm1767, %v1769, %v1762
    %v1771 = vsel %vm1767, %v1766, %v1764
    %v1775 = vadd.f32 %v1556, %v1768
    %v1776 = vadd.f32 %v1557, %v1770
    %v1777 = vadd.f32 %v1558, %v1771
    %s1778 = scalar_lea.vmem [#allocation10], 24
    %v1779 = vld [vmem:[%s1778] sm:$0xf]
    %v1781 = vsel %vm534, %v1779, 0
    %1783 = vmatprep.subr.mxu0 0.0
    %1784 = vmatpush1.msra.mxu0 0.0
    %1785 = vmatprep.subr.mxu0 0.0
    %1786 = vmatpush1.msra.mxu0 0.0
    %1787 = vmatprep.subr.mxu0 0.0
    %1788 = vmatpush1.msra.mxu0 0.0
    %1789 = vmatprep.subr.mxu0 0.0
    %1790 = vmatpush1.msra.mxu0 0.0
    %1791 = vmatprep.subr.mxu0 0.0
    %1792 = vmatpush1.msra.mxu0 0.0
    %1793 = vmatprep.subr.mxu0 0.0
    %1794 = vmatpush1.msra.mxu0 0.0
    %1795 = vmatprep.subr.mxu0 0.0
    %1796 = vmatpush1.msra.mxu0 0.0
    %1797 = vmatprep.subr.mxu0 0.0
    %1798 = vmatpush1.msra.mxu0 0.0
    %1799 = vmatprep.subr.mxu0 0.0
    %1800 = vmatpush1.msra.mxu0 0.0
    %1801 = vmatprep.subr.mxu0 0.0
    %1802 = vmatpush1.msra.mxu0 0.0
    %1803 = vmatprep.subr.mxu0 0.0
    %1804 = vmatpush1.msra.mxu0 0.0
    %1805 = vmatprep.subr.mxu0 %v434
    %1806 = vmatpush1.msra.mxu0 %v432
    %1807 = vmatprep.subr.mxu0 %v428
    %1808 = vmatpush1.msra.mxu0 %v426
    %1809 = vmatprep.subr.mxu0 %v422
    %1810 = vmatpush1.msra.mxu0 %v420
    %1811 = vmatprep.subr.mxu0 %v416
    %1812 = vmatpush1.msra.mxu0 %v414
    %1813 = vmatprep.subr.mxu0 %v410
    %1814 = vmatpush1.msra.mxu0 %v408
    %1815 = vmatprep.subr.mxu0 0.0
    %1816 = vmatpush2.msra.mxu0 0.0
    %1817 = vmatprep.subr.mxu0 0.0
    %1818 = vmatpush2.msra.mxu0 0.0
    %1819 = vmatprep.subr.mxu0 0.0
    %1820 = vmatpush2.msra.mxu0 0.0
    %1821 = vmatprep.subr.mxu0 0.0
    %1822 = vmatpush2.msra.mxu0 0.0
    %1823 = vmatprep.subr.mxu0 0.0
    %1824 = vmatpush2.msra.mxu0 0.0
    %1825 = vmatprep.subr.mxu0 0.0
    %1826 = vmatpush2.msra.mxu0 0.0
    %1827 = vmatprep.subr.mxu0 0.0
    %1828 = vmatpush2.msra.mxu0 0.0
    %1829 = vmatprep.subr.mxu0 0.0
    %1830 = vmatpush2.msra.mxu0 0.0
    %1831 = vmatprep.subr.mxu0 0.0
    %1832 = vmatpush2.msra.mxu0 0.0
    %1833 = vmatprep.subr.mxu0 0.0
    %1834 = vmatpush2.msra.mxu0 0.0
    %1835 = vmatprep.subr.mxu0 0.0
    %1836 = vmatpush2.msra.mxu0 0.0
    %1837 = vmatprep.subr.mxu0 0.0
    %1838 = vmatpush2.msra.mxu0 0.0
    %1839 = vmatprep.subr.mxu0 0.0
    %1840 = vmatpush2.msra.mxu0 0.0
    %1841 = vmatprep.subr.mxu0 0.0
    %1842 = vmatpush2.msra.mxu0 0.0
    %1843 = vmatprep.subr.mxu0 0.0
    %1844 = vmatpush2.msra.mxu0 0.0
    %1845 = vmatprep.subr.mxu0 0.0
    %1846 = vmatpush2.msra.mxu0 0.0
    %1847 = vmatprep.mubr.f32.mxu0 0.0
    %1848 = vmatmul.mubr.f32.gmra.mxu0 %v1781
    %v1849 = vpop.f32.mrf.mxu0
    %v1850 = vadd.f32 0.0, %v1849
    %v1851 = vpop.f32.mrf.mxu0
    %v1852 = vadd.f32 0.0, %v1851
    %1853 = vdwg.mxu0
    %1854 = vmatprep.subr.mxu0 0.0
    %1855 = vmatpush1.msra.mxu0 0.0
    %1856 = vmatprep.subr.mxu0 0.0
    %1857 = vmatpush1.msra.mxu0 0.0
    %1858 = vmatprep.subr.mxu0 0.0
    %1859 = vmatpush1.msra.mxu0 0.0
    %1860 = vmatprep.subr.mxu0 0.0
    %1861 = vmatpush1.msra.mxu0 0.0
    %1862 = vmatprep.subr.mxu0 0.0
    %1863 = vmatpush1.msra.mxu0 0.0
    %1864 = vmatprep.subr.mxu0 0.0
    %1865 = vmatpush1.msra.mxu0 0.0
    %1866 = vmatprep.subr.mxu0 0.0
    %1867 = vmatpush1.msra.mxu0 0.0
    %1868 = vmatprep.subr.mxu0 0.0
    %1869 = vmatpush1.msra.mxu0 0.0
    %1870 = vmatprep.subr.mxu0 0.0
    %1871 = vmatpush1.msra.mxu0 0.0
    %1872 = vmatprep.subr.mxu0 0.0
    %1873 = vmatpush1.msra.mxu0 0.0
    %1874 = vmatprep.subr.mxu0 0.0
    %1875 = vmatpush1.msra.mxu0 0.0
    %1876 = vmatprep.subr.mxu0 %v529
    %1877 = vmatpush1.msra.mxu0 %v527
    %1878 = vmatprep.subr.mxu0 %v523
    %1879 = vmatpush1.msra.mxu0 %v521
    %1880 = vmatprep.subr.mxu0 %v517
    %1881 = vmatpush1.msra.mxu0 %v515
    %1882 = vmatprep.subr.mxu0 %v511
    %1883 = vmatpush1.msra.mxu0 %v509
    %1884 = vmatprep.subr.mxu0 %v505
    %1885 = vmatpush1.msra.mxu0 %v503
    %1886 = vmatprep.subr.mxu0 0.0
    %1887 = vmatpush2.msra.mxu0 0.0
    %1888 = vmatprep.subr.mxu0 0.0
    %1889 = vmatpush2.msra.mxu0 0.0
    %1890 = vmatprep.subr.mxu0 0.0
    %1891 = vmatpush2.msra.mxu0 0.0
    %1892 = vmatprep.subr.mxu0 0.0
    %1893 = vmatpush2.msra.mxu0 0.0
    %1894 = vmatprep.subr.mxu0 0.0
    %1895 = vmatpush2.msra.mxu0 0.0
    %1896 = vmatprep.subr.mxu0 0.0
    %1897 = vmatpush2.msra.mxu0 0.0
    %1898 = vmatprep.subr.mxu0 0.0
    %1899 = vmatpush2.msra.mxu0 0.0
    %1900 = vmatprep.subr.mxu0 0.0
    %1901 = vmatpush2.msra.mxu0 0.0
    %1902 = vmatprep.subr.mxu0 0.0
    %1903 = vmatpush2.msra.mxu0 0.0
    %1904 = vmatprep.subr.mxu0 0.0
    %1905 = vmatpush2.msra.mxu0 0.0
    %1906 = vmatprep.subr.mxu0 0.0
    %1907 = vmatpush2.msra.mxu0 0.0
    %1908 = vmatprep.subr.mxu0 0.0
    %1909 = vmatpush2.msra.mxu0 0.0
    %1910 = vmatprep.subr.mxu0 0.0
    %1911 = vmatpush2.msra.mxu0 0.0
    %1912 = vmatprep.subr.mxu0 0.0
    %1913 = vmatpush2.msra.mxu0 0.0
    %1914 = vmatprep.subr.mxu0 0.0
    %1915 = vmatpush2.msra.mxu0 0.0
    %1916 = vmatprep.subr.mxu0 0.0
    %1917 = vmatpush2.msra.mxu0 0.0
    %1918 = vmatprep.mubr.f32.mxu0 0.0
    %1919 = vmatmul.mubr.f32.gmra.mxu0 %v1781
    %v1920 = vpop.f32.mrf.mxu0
    %v1921 = vadd.f32 0.0, %v1920
    %v1922 = vpop.f32.mrf.mxu0
    %v1923 = vadd.f32 0.0, %v1922
    %1924 = vdwg.mxu0
    %v1929 = vcombine.low %v1850, %v1852
    %v1930 = vcombine.low %v1921, %v1923
    %1933 = vst [vmem:[#allocation3 + $0x4] sm:$0xff] %v1929
    %1934 = vst [vmem:[#allocation3 + $0xc] sm:$0xff] %v1930
    %v1935 = vld [vmem:[#allocation3 + $0x4] sm:$0xff]
    %v1936 = vld [vmem:[#allocation3 + $0xc] sm:$0xff]
    %v1937 = vld [vmem:[#allocation3 + $0x14] sm:$0xf]
    %s1938 = scalar_lea.vmem [#allocation13], 6
    %v1939 = vld [vmem:[%s1938] ss:$8 sm:$0xf]
    %v1941 = vlaneseq
    %v1942 = vshrl.u32 %v1941, 7
    %v1943 = vsub.s32 0, %v1942
    %v1944 = vrot.slane %v1939, %v1943
    %v1945 = vlaneseq
    %v1946 = vshrl.u32 %v1945, 7
    %v1947 = vsub.s32 1, %v1946
    %v1948 = vrot.slane %v1939, %v1947
    %v1949 = vlaneseq
    %v1950 = vshrl.u32 %v1949, 7
    %v1951 = vsub.s32 2, %v1950
    %v1952 = vrot.slane %v1939, %v1951
    %v1953 = vlaneseq
    %v1954 = vshrl.u32 %v1953, 7
    %v1955 = vsub.s32 3, %v1954
    %v1956 = vrot.slane %v1939, %v1955
    %v1957 = vcombine.low %v1944, %v1948
    %v1958 = vcombine.low %v1952, %v1956
    %1959 = vrot.lane.b32.xlu0 %v1957, 15
    %v1960 = vpop.permute.xlu0 %1959
    %1961 = vrot.lane.b32.xlu0 %v1958, 15
    %v1962 = vpop.permute.xlu0 %1961
    %v1963 = vrot.slane %v1960, 4
    %v1964 = vrot.slane %v1962, 4
    %vm1965 = vcmask 121856
    %v1966 = vsel %vm1965, %v1963, %v1960
    %v1967 = vsel %vm721, %v1963, %v1964
    %v1968 = vsel %vm1965, %v1967, %v1962
    %v1972 = vmul.f32 %v1935, %v1966
    %v1973 = vmul.f32 %v1936, %v1968
    %v1974 = vmul.f32 %v1937, %v1964
    %1978 = vrot.lane.b32.xlu0 %v1972, 96
    %v1979 = vpop.permute.xlu0 %1978
    %1980 = vrot.lane.b32.xlu0 %v1973, 96
    %v1981 = vpop.permute.xlu0 %1980
    %1982 = vrot.lane.b32.xlu0 %v1974, 96
    %v1983 = vpop.permute.xlu0 %1982
    %v1984 = vrot.slane %v1979, 4
    %v1985 = vrot.slane %v1981, 4
    %vm1986 = vcmask 785408
    %v1987 = vsel %vm1986, %v1984, %v1979
    %v1988 = vsel %vm721, %v1984, %v1985
    %v1989 = vsel %vm1986, %v1988, %v1981
    %v1990 = vsel %vm1986, %v1985, %v1983
    %v1994 = vadd.f32 %v1775, %v1987
    %v1995 = vadd.f32 %v1776, %v1989
    %v1996 = vadd.f32 %v1777, %v1990
    %s1997 = scalar_lea.vmem [#allocation10], 28
    %v1998 = vld [vmem:[%s1997] sm:$0xf]
    %v2000 = vsel %vm534, %v1998, 0
    %2002 = vmatprep.subr.mxu0 0.0
    %2003 = vmatpush1.msra.mxu0 0.0
    %2004 = vmatprep.subr.mxu0 0.0
    %2005 = vmatpush1.msra.mxu0 0.0
    %2006 = vmatprep.subr.mxu0 0.0
    %2007 = vmatpush1.msra.mxu0 0.0
    %2008 = vmatprep.subr.mxu0 0.0
    %2009 = vmatpush1.msra.mxu0 0.0
    %2010 = vmatprep.subr.mxu0 0.0
    %2011 = vmatpush1.msra.mxu0 0.0
    %2012 = vmatprep.subr.mxu0 0.0
    %2013 = vmatpush1.msra.mxu0 0.0
    %2014 = vmatprep.subr.mxu0 0.0
    %2015 = vmatpush1.msra.mxu0 0.0
    %2016 = vmatprep.subr.mxu0 0.0
    %2017 = vmatpush1.msra.mxu0 0.0
    %2018 = vmatprep.subr.mxu0 0.0
    %2019 = vmatpush1.msra.mxu0 0.0
    %2020 = vmatprep.subr.mxu0 0.0
    %2021 = vmatpush1.msra.mxu0 0.0
    %2022 = vmatprep.subr.mxu0 0.0
    %2023 = vmatpush1.msra.mxu0 0.0
    %2024 = vmatprep.subr.mxu0 %v434
    %2025 = vmatpush1.msra.mxu0 %v432
    %2026 = vmatprep.subr.mxu0 %v428
    %2027 = vmatpush1.msra.mxu0 %v426
    %2028 = vmatprep.subr.mxu0 %v422
    %2029 = vmatpush1.msra.mxu0 %v420
    %2030 = vmatprep.subr.mxu0 %v416
    %2031 = vmatpush1.msra.mxu0 %v414
    %2032 = vmatprep.subr.mxu0 %v410
    %2033 = vmatpush1.msra.mxu0 %v408
    %2034 = vmatprep.subr.mxu0 0.0
    %2035 = vmatpush2.msra.mxu0 0.0
    %2036 = vmatprep.subr.mxu0 0.0
    %2037 = vmatpush2.msra.mxu0 0.0
    %2038 = vmatprep.subr.mxu0 0.0
    %2039 = vmatpush2.msra.mxu0 0.0
    %2040 = vmatprep.subr.mxu0 0.0
    %2041 = vmatpush2.msra.mxu0 0.0
    %2042 = vmatprep.subr.mxu0 0.0
    %2043 = vmatpush2.msra.mxu0 0.0
    %2044 = vmatprep.subr.mxu0 0.0
    %2045 = vmatpush2.msra.mxu0 0.0
    %2046 = vmatprep.subr.mxu0 0.0
    %2047 = vmatpush2.msra.mxu0 0.0
    %2048 = vmatprep.subr.mxu0 0.0
    %2049 = vmatpush2.msra.mxu0 0.0
    %2050 = vmatprep.subr.mxu0 0.0
    %2051 = vmatpush2.msra.mxu0 0.0
    %2052 = vmatprep.subr.mxu0 0.0
    %2053 = vmatpush2.msra.mxu0 0.0
    %2054 = vmatprep.subr.mxu0 0.0
    %2055 = vmatpush2.msra.mxu0 0.0
    %2056 = vmatprep.subr.mxu0 0.0
    %2057 = vmatpush2.msra.mxu0 0.0
    %2058 = vmatprep.subr.mxu0 0.0
    %2059 = vmatpush2.msra.mxu0 0.0
    %2060 = vmatprep.subr.mxu0 0.0
    %2061 = vmatpush2.msra.mxu0 0.0
    %2062 = vmatprep.subr.mxu0 0.0
    %2063 = vmatpush2.msra.mxu0 0.0
    %2064 = vmatprep.subr.mxu0 0.0
    %2065 = vmatpush2.msra.mxu0 0.0
    %2066 = vmatprep.mubr.f32.mxu0 0.0
    %2067 = vmatmul.mubr.f32.gmra.mxu0 %v2000
    %v2068 = vpop.f32.mrf.mxu0
    %v2069 = vadd.f32 0.0, %v2068
    %v2070 = vpop.f32.mrf.mxu0
    %v2071 = vadd.f32 0.0, %v2070
    %2072 = vdwg.mxu0
    %2073 = vmatprep.subr.mxu0 0.0
    %2074 = vmatpush1.msra.mxu0 0.0
    %2075 = vmatprep.subr.mxu0 0.0
    %2076 = vmatpush1.msra.mxu0 0.0
    %2077 = vmatprep.subr.mxu0 0.0
    %2078 = vmatpush1.msra.mxu0 0.0
    %2079 = vmatprep.subr.mxu0 0.0
    %2080 = vmatpush1.msra.mxu0 0.0
    %2081 = vmatprep.subr.mxu0 0.0
    %2082 = vmatpush1.msra.mxu0 0.0
    %2083 = vmatprep.subr.mxu0 0.0
    %2084 = vmatpush1.msra.mxu0 0.0
    %2085 = vmatprep.subr.mxu0 0.0
    %2086 = vmatpush1.msra.mxu0 0.0
    %2087 = vmatprep.subr.mxu0 0.0
    %2088 = vmatpush1.msra.mxu0 0.0
    %2089 = vmatprep.subr.mxu0 0.0
    %2090 = vmatpush1.msra.mxu0 0.0
    %2091 = vmatprep.subr.mxu0 0.0
    %2092 = vmatpush1.msra.mxu0 0.0
    %2093 = vmatprep.subr.mxu0 0.0
    %2094 = vmatpush1.msra.mxu0 0.0
    %2095 = vmatprep.subr.mxu0 %v529
    %2096 = vmatpush1.msra.mxu0 %v527
    %2097 = vmatprep.subr.mxu0 %v523
    %2098 = vmatpush1.msra.mxu0 %v521
    %2099 = vmatprep.subr.mxu0 %v517
    %2100 = vmatpush1.msra.mxu0 %v515
    %2101 = vmatprep.subr.mxu0 %v511
    %2102 = vmatpush1.msra.mxu0 %v509
    %2103 = vmatprep.subr.mxu0 %v505
    %2104 = vmatpush1.msra.mxu0 %v503
    %2105 = vmatprep.subr.mxu0 0.0
    %2106 = vmatpush2.msra.mxu0 0.0
    %2107 = vmatprep.subr.mxu0 0.0
    %2108 = vmatpush2.msra.mxu0 0.0
    %2109 = vmatprep.subr.mxu0 0.0
    %2110 = vmatpush2.msra.mxu0 0.0
    %2111 = vmatprep.subr.mxu0 0.0
    %2112 = vmatpush2.msra.mxu0 0.0
    %2113 = vmatprep.subr.mxu0 0.0
    %2114 = vmatpush2.msra.mxu0 0.0
    %2115 = vmatprep.subr.mxu0 0.0
    %2116 = vmatpush2.msra.mxu0 0.0
    %2117 = vmatprep.subr.mxu0 0.0
    %2118 = vmatpush2.msra.mxu0 0.0
    %2119 = vmatprep.subr.mxu0 0.0
    %2120 = vmatpush2.msra.mxu0 0.0
    %2121 = vmatprep.subr.mxu0 0.0
    %2122 = vmatpush2.msra.mxu0 0.0
    %2123 = vmatprep.subr.mxu0 0.0
    %2124 = vmatpush2.msra.mxu0 0.0
    %2125 = vmatprep.subr.mxu0 0.0
    %2126 = vmatpush2.msra.mxu0 0.0
    %2127 = vmatprep.subr.mxu0 0.0
    %2128 = vmatpush2.msra.mxu0 0.0
    %2129 = vmatprep.subr.mxu0 0.0
    %2130 = vmatpush2.msra.mxu0 0.0
    %2131 = vmatprep.subr.mxu0 0.0
    %2132 = vmatpush2.msra.mxu0 0.0
    %2133 = vmatprep.subr.mxu0 0.0
    %2134 = vmatpush2.msra.mxu0 0.0
    %2135 = vmatprep.subr.mxu0 0.0
    %2136 = vmatpush2.msra.mxu0 0.0
    %2137 = vmatprep.mubr.f32.mxu0 0.0
    %2138 = vmatmul.mubr.f32.gmra.mxu0 %v2000
    %v2139 = vpop.f32.mrf.mxu0
    %v2140 = vadd.f32 0.0, %v2139
    %v2141 = vpop.f32.mrf.mxu0
    %v2142 = vadd.f32 0.0, %v2141
    %2143 = vdwg.mxu0
    %v2148 = vcombine.low %v2069, %v2071
    %v2149 = vcombine.low %v2140, %v2142
    %2152 = vst [vmem:[#allocation3 + $0x4] sm:$0xff] %v2148
    %2153 = vst [vmem:[#allocation3 + $0xc] sm:$0xff] %v2149
    %v2154 = vld [vmem:[#allocation3 + $0x4] sm:$0xff]
    %v2155 = vld [vmem:[#allocation3 + $0xc] sm:$0xff]
    %v2156 = vld [vmem:[#allocation3 + $0x14] sm:$0xf]
    %s2157 = scalar_lea.vmem [#allocation13], 7
    %v2158 = vld [vmem:[%s2157] ss:$8 sm:$0xf]
    %v2160 = vlaneseq
    %v2161 = vshrl.u32 %v2160, 7
    %v2162 = vsub.s32 0, %v2161
    %v2163 = vrot.slane %v2158, %v2162
    %v2164 = vlaneseq
    %v2165 = vshrl.u32 %v2164, 7
    %v2166 = vsub.s32 1, %v2165
    %v2167 = vrot.slane %v2158, %v2166
    %v2168 = vlaneseq
    %v2169 = vshrl.u32 %v2168, 7
    %v2170 = vsub.s32 2, %v2169
    %v2171 = vrot.slane %v2158, %v2170
    %v2172 = vlaneseq
    %v2173 = vshrl.u32 %v2172, 7
    %v2174 = vsub.s32 3, %v2173
    %v2175 = vrot.slane %v2158, %v2174
    %v2176 = vcombine.low %v2163, %v2167
    %v2177 = vcombine.low %v2171, %v2175
    %2178 = vrot.lane.b32.xlu0 %v2176, 16
    %v2179 = vpop.permute.xlu0 %2178
    %2180 = vrot.lane.b32.xlu0 %v2177, 16
    %v2181 = vpop.permute.xlu0 %2180
    %v2182 = vrot.slane %v2179, 4
    %v2183 = vrot.slane %v2181, 4
    %vm2184 = vcmask 130048
    %v2185 = vsel %vm2184, %v2182, %v2179
    %v2186 = vsel %vm721, %v2182, %v2183
    %v2187 = vsel %vm2184, %v2186, %v2181
    %v2191 = vmul.f32 %v2154, %v2185
    %v2192 = vmul.f32 %v2155, %v2187
    %v2193 = vmul.f32 %v2156, %v2183
    %2197 = vrot.lane.b32.xlu0 %v2191, 95
    %v2198 = vpop.permute.xlu0 %2197
    %2199 = vrot.lane.b32.xlu0 %v2192, 95
    %v2200 = vpop.permute.xlu0 %2199
    %2201 = vrot.lane.b32.xlu0 %v2193, 95
    %v2202 = vpop.permute.xlu0 %2201
    %v2203 = vrot.slane %v2198, 4
    %v2204 = vrot.slane %v2200, 4
    %vm2205 = vcmask 777216
    %v2206 = vsel %vm2205, %v2203, %v2198
    %v2207 = vsel %vm721, %v2203, %v2204
    %v2208 = vsel %vm2205, %v2207, %v2200
    %v2209 = vsel %vm2205, %v2204, %v2202
    %v2213 = vadd.f32 %v1994, %v2206
    %v2214 = vadd.f32 %v1995, %v2208
    %v2215 = vadd.f32 %v1996, %v2209
    %s2216 = scalar_lea.vmem [#allocation10], 32
    %v2217 = vld [vmem:[%s2216] sm:$0xf]
    %v2219 = vsel %vm534, %v2217, 0
    %2221 = vmatprep.subr.mxu0 0.0
    %2222 = vmatpush1.msra.mxu0 0.0
    %2223 = vmatprep.subr.mxu0 0.0
    %2224 = vmatpush1.msra.mxu0 0.0
    %2225 = vmatprep.subr.mxu0 0.0
    %2226 = vmatpush1.msra.mxu0 0.0
    %2227 = vmatprep.subr.mxu0 0.0
    %2228 = vmatpush1.msra.mxu0 0.0
    %2229 = vmatprep.subr.mxu0 0.0
    %2230 = vmatpush1.msra.mxu0 0.0
    %2231 = vmatprep.subr.mxu0 0.0
    %2232 = vmatpush1.msra.mxu0 0.0
    %2233 = vmatprep.subr.mxu0 0.0
    %2234 = vmatpush1.msra.mxu0 0.0
    %2235 = vmatprep.subr.mxu0 0.0
    %2236 = vmatpush1.msra.mxu0 0.0
    %2237 = vmatprep.subr.mxu0 0.0
    %2238 = vmatpush1.msra.mxu0 0.0
    %2239 = vmatprep.subr.mxu0 0.0
    %2240 = vmatpush1.msra.mxu0 0.0
    %2241 = vmatprep.subr.mxu0 0.0
    %2242 = vmatpush1.msra.mxu0 0.0
    %2243 = vmatprep.subr.mxu0 %v434
    %2244 = vmatpush1.msra.mxu0 %v432
    %2245 = vmatprep.subr.mxu0 %v428
    %2246 = vmatpush1.msra.mxu0 %v426
    %2247 = vmatprep.subr.mxu0 %v422
    %2248 = vmatpush1.msra.mxu0 %v420
    %2249 = vmatprep.subr.mxu0 %v416
    %2250 = vmatpush1.msra.mxu0 %v414
    %2251 = vmatprep.subr.mxu0 %v410
    %2252 = vmatpush1.msra.mxu0 %v408
    %2253 = vmatprep.subr.mxu0 0.0
    %2254 = vmatpush2.msra.mxu0 0.0
    %2255 = vmatprep.subr.mxu0 0.0
    %2256 = vmatpush2.msra.mxu0 0.0
    %2257 = vmatprep.subr.mxu0 0.0
    %2258 = vmatpush2.msra.mxu0 0.0
    %2259 = vmatprep.subr.mxu0 0.0
    %2260 = vmatpush2.msra.mxu0 0.0
    %2261 = vmatprep.subr.mxu0 0.0
    %2262 = vmatpush2.msra.mxu0 0.0
    %2263 = vmatprep.subr.mxu0 0.0
    %2264 = vmatpush2.msra.mxu0 0.0
    %2265 = vmatprep.subr.mxu0 0.0
    %2266 = vmatpush2.msra.mxu0 0.0
    %2267 = vmatprep.subr.mxu0 0.0
    %2268 = vmatpush2.msra.mxu0 0.0
    %2269 = vmatprep.subr.mxu0 0.0
    %2270 = vmatpush2.msra.mxu0 0.0
    %2271 = vmatprep.subr.mxu0 0.0
    %2272 = vmatpush2.msra.mxu0 0.0
    %2273 = vmatprep.subr.mxu0 0.0
    %2274 = vmatpush2.msra.mxu0 0.0
    %2275 = vmatprep.subr.mxu0 0.0
    %2276 = vmatpush2.msra.mxu0 0.0
    %2277 = vmatprep.subr.mxu0 0.0
    %2278 = vmatpush2.msra.mxu0 0.0
    %2279 = vmatprep.subr.mxu0 0.0
    %2280 = vmatpush2.msra.mxu0 0.0
    %2281 = vmatprep.subr.mxu0 0.0
    %2282 = vmatpush2.msra.mxu0 0.0
    %2283 = vmatprep.subr.mxu0 0.0
    %2284 = vmatpush2.msra.mxu0 0.0
    %2285 = vmatprep.mubr.f32.mxu0 0.0
    %2286 = vmatmul.mubr.f32.gmra.mxu0 %v2219
    %v2287 = vpop.f32.mrf.mxu0
    %v2288 = vadd.f32 0.0, %v2287
    %v2289 = vpop.f32.mrf.mxu0
    %v2290 = vadd.f32 0.0, %v2289
    %2291 = vdwg.mxu0
    %2292 = vmatprep.subr.mxu0 0.0
    %2293 = vmatpush1.msra.mxu0 0.0
    %2294 = vmatprep.subr.mxu0 0.0
    %2295 = vmatpush1.msra.mxu0 0.0
    %2296 = vmatprep.subr.mxu0 0.0
    %2297 = vmatpush1.msra.mxu0 0.0
    %2298 = vmatprep.subr.mxu0 0.0
    %2299 = vmatpush1.msra.mxu0 0.0
    %2300 = vmatprep.subr.mxu0 0.0
    %2301 = vmatpush1.msra.mxu0 0.0
    %2302 = vmatprep.subr.mxu0 0.0
    %2303 = vmatpush1.msra.mxu0 0.0
    %2304 = vmatprep.subr.mxu0 0.0
    %2305 = vmatpush1.msra.mxu0 0.0
    %2306 = vmatprep.subr.mxu0 0.0
    %2307 = vmatpush1.msra.mxu0 0.0
    %2308 = vmatprep.subr.mxu0 0.0
    %2309 = vmatpush1.msra.mxu0 0.0
    %2310 = vmatprep.subr.mxu0 0.0
    %2311 = vmatpush1.msra.mxu0 0.0
    %2312 = vmatprep.subr.mxu0 0.0
    %2313 = vmatpush1.msra.mxu0 0.0
    %2314 = vmatprep.subr.mxu0 %v529
    %2315 = vmatpush1.msra.mxu0 %v527
    %2316 = vmatprep.subr.mxu0 %v523
    %2317 = vmatpush1.msra.mxu0 %v521
    %2318 = vmatprep.subr.mxu0 %v517
    %2319 = vmatpush1.msra.mxu0 %v515
    %2320 = vmatprep.subr.mxu0 %v511
    %2321 = vmatpush1.msra.mxu0 %v509
    %2322 = vmatprep.subr.mxu0 %v505
    %2323 = vmatpush1.msra.mxu0 %v503
    %2324 = vmatprep.subr.mxu0 0.0
    %2325 = vmatpush2.msra.mxu0 0.0
    %2326 = vmatprep.subr.mxu0 0.0
    %2327 = vmatpush2.msra.mxu0 0.0
    %2328 = vmatprep.subr.mxu0 0.0
    %2329 = vmatpush2.msra.mxu0 0.0
    %2330 = vmatprep.subr.mxu0 0.0
    %2331 = vmatpush2.msra.mxu0 0.0
    %2332 = vmatprep.subr.mxu0 0.0
    %2333 = vmatpush2.msra.mxu0 0.0
    %2334 = vmatprep.subr.mxu0 0.0
    %2335 = vmatpush2.msra.mxu0 0.0
    %2336 = vmatprep.subr.mxu0 0.0
    %2337 = vmatpush2.msra.mxu0 0.0
    %2338 = vmatprep.subr.mxu0 0.0
    %2339 = vmatpush2.msra.mxu0 0.0
    %2340 = vmatprep.subr.mxu0 0.0
    %2341 = vmatpush2.msra.mxu0 0.0
    %2342 = vmatprep.subr.mxu0 0.0
    %2343 = vmatpush2.msra.mxu0 0.0
    %2344 = vmatprep.subr.mxu0 0.0
    %2345 = vmatpush2.msra.mxu0 0.0
    %2346 = vmatprep.subr.mxu0 0.0
    %2347 = vmatpush2.msra.mxu0 0.0
    %2348 = vmatprep.subr.mxu0 0.0
    %2349 = vmatpush2.msra.mxu0 0.0
    %2350 = vmatprep.subr.mxu0 0.0
    %2351 = vmatpush2.msra.mxu0 0.0
    %2352 = vmatprep.subr.mxu0 0.0
    %2353 = vmatpush2.msra.mxu0 0.0
    %2354 = vmatprep.subr.mxu0 0.0
    %2355 = vmatpush2.msra.mxu0 0.0
    %2356 = vmatprep.mubr.f32.mxu0 0.0
    %2357 = vmatmul.mubr.f32.gmra.mxu0 %v2219
    %v2358 = vpop.f32.mrf.mxu0
    %v2359 = vadd.f32 0.0, %v2358
    %v2360 = vpop.f32.mrf.mxu0
    %v2361 = vadd.f32 0.0, %v2360
    %2362 = vdwg.mxu0
    %v2367 = vcombine.low %v2288, %v2290
    %v2368 = vcombine.low %v2359, %v2361
    %2371 = vst [vmem:[#allocation3 + $0x4] sm:$0xff] %v2367
    %2372 = vst [vmem:[#allocation3 + $0xc] sm:$0xff] %v2368
    %v2373 = vld [vmem:[#allocation3 + $0x4] sm:$0xff]
    %v2374 = vld [vmem:[#allocation3 + $0xc] sm:$0xff]
    %v2375 = vld [vmem:[#allocation3 + $0x14] sm:$0xf]
    %s2376 = scalar_lea.vmem [#allocation13], 32
    %v2377 = vld [vmem:[%s2376] ss:$8 sm:$0xf]
    %v2379 = vlaneseq
    %v2380 = vshrl.u32 %v2379, 7
    %v2381 = vsub.s32 0, %v2380
    %v2382 = vrot.slane %v2377, %v2381
    %v2383 = vlaneseq
    %v2384 = vshrl.u32 %v2383, 7
    %v2385 = vsub.s32 1, %v2384
    %v2386 = vrot.slane %v2377, %v2385
    %v2387 = vlaneseq
    %v2388 = vshrl.u32 %v2387, 7
    %v2389 = vsub.s32 2, %v2388
    %v2390 = vrot.slane %v2377, %v2389
    %v2391 = vlaneseq
    %v2392 = vshrl.u32 %v2391, 7
    %v2393 = vsub.s32 3, %v2392
    %v2394 = vrot.slane %v2377, %v2393
    %v2395 = vcombine.low %v2382, %v2386
    %v2396 = vcombine.low %v2390, %v2394
    %2397 = vrot.lane.b32.xlu0 %v2395, 17
    %v2398 = vpop.permute.xlu0 %2397
    %2399 = vrot.lane.b32.xlu0 %v2396, 17
    %v2400 = vpop.permute.xlu0 %2399
    %v2401 = vrot.slane %v2398, 4
    %v2402 = vrot.slane %v2400, 4
    %vm2403 = vcmask 138240
    %v2404 = vsel %vm2403, %v2401, %v2398
    %v2405 = vsel %vm721, %v2401, %v2402
    %v2406 = vsel %vm2403, %v2405, %v2400
    %v2410 = vmul.f32 %v2373, %v2404
    %v2411 = vmul.f32 %v2374, %v2406
    %v2412 = vmul.f32 %v2375, %v2402
    %2416 = vrot.lane.b32.xlu0 %v2410, 94
    %v2417 = vpop.permute.xlu0 %2416
    %2418 = vrot.lane.b32.xlu0 %v2411, 94
    %v2419 = vpop.permute.xlu0 %2418
    %2420 = vrot.lane.b32.xlu0 %v2412, 94
    %v2421 = vpop.permute.xlu0 %2420
    %v2422 = vrot.slane %v2417, 4
    %v2423 = vrot.slane %v2419, 4
    %vm2424 = vcmask 769024
    %v2425 = vsel %vm2424, %v2422, %v2417
    %v2426 = vsel %vm721, %v2422, %v2423
    %v2427 = vsel %vm2424, %v2426, %v2419
    %v2428 = vsel %vm2424, %v2423, %v2421
    %v2432 = vadd.f32 %v2213, %v2425
    %v2433 = vadd.f32 %v2214, %v2427
    %v2434 = vadd.f32 %v2215, %v2428
    %v2438 = vcombine.high %v2432, %v2432
    %v2439 = vcombine.high %v2433, %v2433
    %2440 = vrot.lane.b32.xlu0 %v2432, 17
    %v2441 = vpop.permute.xlu0 %2440
    %2442 = vrot.lane.b32.xlu0 %v2438, 17
    %v2443 = vpop.permute.xlu0 %2442
    %2444 = vrot.lane.b32.xlu0 %v2433, 17
    %v2445 = vpop.permute.xlu0 %2444
    %2446 = vrot.lane.b32.xlu0 %v2439, 17
    %v2447 = vpop.permute.xlu0 %2446
    %2448 = vrot.lane.b32.xlu0 %v2434, 17
    %v2449 = vpop.permute.xlu0 %2448
    %v2450 = vsel %vm2403, %v2441, %v2443
    %v2451 = vsel %vm2403, %v2443, %v2445
    %v2452 = vsel %vm2403, %v2445, %v2447
    %v2453 = vsel %vm2403, %v2447, %v2449
    %v2458 = vsel %vm721, %v2450, 0.0
    %v2459 = vsel %vm721, %v2451, 0.0
    %v2460 = vadd.f32 %v2458, %v2459
    %v2461 = vsel %vm721, %v2452, 0.0
    %v2462 = vadd.f32 %v2460, %v2461
    %v2463 = vsel %vm721, %v2453, 0.0
    %v2464 = vadd.f32 %v2462, %v2463
    %2465 = vadd.xlane.f32.xlu0 %v2464
    %v2466 = vpop.xlane.xlu0 %2465
    %v2467 = vmul.f32 %v2432, %v2432
    %v2468 = vmul.f32 %v2433, %v2433
    %v2469 = vmul.f32 %v2434, %v2434
    %v2473 = vcombine.high %v2467, %v2467
    %v2474 = vcombine.high %v2468, %v2468
    %2475 = vrot.lane.b32.xlu0 %v2467, 17
    %v2476 = vpop.permute.xlu0 %2475
    %2477 = vrot.lane.b32.xlu0 %v2473, 17
    %v2478 = vpop.permute.xlu0 %2477
    %2479 = vrot.lane.b32.xlu0 %v2468, 17
    %v2480 = vpop.permute.xlu0 %2479
    %2481 = vrot.lane.b32.xlu0 %v2474, 17
    %v2482 = vpop.permute.xlu0 %2481
    %2483 = vrot.lane.b32.xlu0 %v2469, 17
    %v2484 = vpop.permute.xlu0 %2483
    %v2485 = vsel %vm2403, %v2476, %v2478
    %v2486 = vsel %vm2403, %v2478, %v2480
    %v2487 = vsel %vm2403, %v2480, %v2482
    %v2488 = vsel %vm2403, %v2482, %v2484
    %v2493 = vsel %vm721, %v2485, 0.0
    %v2494 = vsel %vm721, %v2486, 0.0
    %v2495 = vadd.f32 %v2493, %v2494
    %v2496 = vsel %vm721, %v2487, 0.0
    %v2497 = vadd.f32 %v2495, %v2496
    %v2498 = vsel %vm721, %v2488, 0.0
    %v2499 = vadd.f32 %v2497, %v2498
    %2500 = vadd.xlane.f32.xlu0 %v2499
    %v2501 = vpop.xlane.xlu0 %2500
    %v2502 = vmul.f32 %v2466, 0.001953125
    %v2503 = vmul.f32 %v2501, 0.001953125
    %v2504 = vmul.f32 %v2502, %v2502
    %v2505 = vsub.f32 %v2503, %v2504
    %v2506 = vld [vmem:[%s7] sm:$0xf]
    %v2507 = vld [vmem:[%s7 + $0x4] sm:$0xf]
    %v2510 = vunpack.c.l.s4 839922192
    %v2511 = vunpack.c.0.s8 %v2510
    %v2512 = vlaneseq
    %v2513 = vshrl.u32 %v2512, 7
    %v2514 = vsub.s32 %v2511, %v2513
    %v2515 = vrot.slane %v2502, %v2514
    %v2517 = vsub.f32 %v2432, %v2515
    %v2518 = vsub.f32 %v2433, %v2515
    %v2519 = vsub.f32 %v2434, %v2515
    %v2520 = vadd.f32 %v2505, 1e-05
    %v2521 = vrsqrt.pop %v2520
    %v2524 = vunpack.c.l.s4 839922192
    %v2525 = vunpack.c.0.s8 %v2524
    %v2526 = vlaneseq
    %v2527 = vshrl.u32 %v2526, 7
    %v2528 = vsub.s32 %v2525, %v2527
    %v2529 = vrot.slane %v2521, %v2528
    %v2531 = vmul.f32 %v2517, %v2529
    %v2532 = vmul.f32 %v2518, %v2529
    %v2533 = vmul.f32 %v2519, %v2529
    %2535 = vset.pattern.permute.xlu0 0
    %2536 = vperm.xlu0 %2535, %v2506
    %v2537 = vpop.permute.xlu0 %2536
    %v2539 = vunpack.c.l.s4 839922192
    %v2540 = vunpack.c.0.s8 %v2539
    %v2541 = vlaneseq
    %v2542 = vshrl.u32 %v2541, 7
    %v2543 = vsub.s32 %v2540, %v2542
    %v2544 = vrot.slane %v2537, %v2543
    %v2546 = vmul.f32 %v2531, %v2544
    %v2547 = vmul.f32 %v2532, %v2544
    %v2548 = vmul.f32 %v2533, %v2544
    %2550 = vset.pattern.permute.xlu0 0
    %2551 = vperm.xlu0 %2550, %v2507
    %v2552 = vpop.permute.xlu0 %2551
    %v2554 = vunpack.c.l.s4 839922192
    %v2555 = vunpack.c.0.s8 %v2554
    %v2556 = vlaneseq
    %v2557 = vshrl.u32 %v2556, 7
    %v2558 = vsub.s32 %v2555, %v2557
    %v2559 = vrot.slane %v2552, %v2558
    %v2561 = vadd.f32 %v2546, %v2559
    %v2562 = vadd.f32 %v2547, %v2559
    %v2563 = vadd.f32 %v2548, %v2559
    %v2567 = vcombine.low %v2561, %v2561
    %v2568 = vcombine.low %v2562, %v2562
    %v2569 = vcombine.low %v2563, %v2563
    %2570 = vrot.lane.b32.xlu0 %v2567, 17
    %v2571 = vpop.permute.xlu0 %2570
    %2572 = vrot.lane.b32.xlu0 %v2561, 17
    %v2573 = vpop.permute.xlu0 %2572
    %2574 = vrot.lane.b32.xlu0 %v2568, 17
    %v2575 = vpop.permute.xlu0 %2574
    %2576 = vrot.lane.b32.xlu0 %v2562, 17
    %v2577 = vpop.permute.xlu0 %2576
    %2578 = vrot.lane.b32.xlu0 %v2569, 17
    %v2579 = vpop.permute.xlu0 %2578
    %v2580 = vsel %vm2403, %v2571, %v2573
    %v2581 = vsel %vm2403, %v2573, %v2575
    %v2582 = vsel %vm2403, %v2575, %v2577
    %v2583 = vsel %vm2403, %v2577, %v2579
    %2588 = vst [vmem:[#allocation15] sm:$0xf0] %v2580
    %2589 = vst [vmem:[#allocation15 + $0x8] sm:$0xf0] %v2581
    %2590 = vst [vmem:[#allocation15 + $0x10] sm:$0xf0] %v2582
    %2591 = vst [vmem:[#allocation15 + $0x18] sm:$0xf0] %v2583
    // Predicated region
    $region58: #{tpu_custom_call.1} parent=1 // pred_check
      _
    $region59: #{tpu_custom_call.1} parent=1 // pred_check_branch
      %2593 = sbr.rel (0) target = $region61
    $region60: #{tpu_custom_call.1} parent=1 // pred_region
      %s2595 = ssub.s32 512, 512
      %2596 = vsyncadd [#allocation6], %s2595
      %s2598 = sshll.u32 [#allocation15], 4
      %s2599 = int_to_ptr.vmem [resolvable:$true] %s2598
      %2601 = dma.vmem_to_hbm [thread:$0]  %s2599, 512, %s8, [#allocation6]
    $region61: #{tpu_custom_call.1} parent=1 // pred_fallthru
      _
    // Predicated region
    $region62: #{tpu_custom_call.1} parent=1 // pred_check
      _
    $region63: #{tpu_custom_call.1} parent=1 // pred_check_branch
      %2603 = sbr.rel (0) target = $region65
    $region64: #{tpu_custom_call.1} parent=1 // pred_region
      %2604 = dma.done [#allocation6], 512
    $region65: #{tpu_custom_call.1} parent=1 // pred_fallthru
      _
    %2605 = vsyncpa [#allocation5], 1
    %2606 = vsyncpa [#allocation8], 1
    %2607 = vsyncpa [#allocation11], 1
    %2608 = vsyncpa [#allocation14], 1
    %2609 = vsyncpa [#allocation6], 1

</llo_original>
